<compile_context>
chip_gen: v7x
topology: tpu7x:2x2x1
jax: 0.10.0
libtpu: 0.0.40
codegen_flags: <defaults>
</compile_context>

<pallas_src>
import functools

import jax
import jax.numpy as jnp
from jax import lax
from jax.experimental import pallas as pl
from jax.experimental.pallas import tpu as pltpu


def _seg_softmax_kernel(x_ref, w1t_ref, b1_ref, w2t_ref, b2_ref, o_ref,
                        *, v_total, tile, needs_mask):
    """One (voxel-tile, batch) block.

    Shapes (channels on sublanes, voxels on lanes -> lane-dense I/O):
      x_ref   : (1, C_in, T)
      w1t_ref : (HID, C_in)   b1_ref : (HID, 1)
      w2t_ref : (S,   HID)    b2_ref : (S,   1)
      o_ref   : (1, S, T)
    """
    x = x_ref[0].astype(jnp.float32)                      # (C_in, T)

    if needs_mask:
        # Ragged last tile: zero the out-of-range lanes. The OOB output
        # stores are discarded anyway, but keep exp() inputs finite.
        base = pl.program_id(0) * tile
        lane = base + lax.broadcasted_iota(jnp.int32, x.shape, dimension=1)
        x = jnp.where(lane < v_total, x, 0.0)

    # First pointwise conv on the MXU (K = C_in contraction), then ReLU.
    h = jnp.dot(w1t_ref[...], x, preferred_element_type=jnp.float32)
    h = jnp.maximum(h + b1_ref[...], 0.0)                 # (HID, T)

    # Second pointwise conv on the MXU (K = HID contraction).
    logits = jnp.dot(w2t_ref[...], h,
                     preferred_element_type=jnp.float32) + b2_ref[...]

    # Channel softmax: classes live on sublanes -> XLU sublane reductions
    # (VPU slots stay free; kernel remains pinned at the HBM roofline).
    m = jnp.max(logits, axis=0, keepdims=True)            # (1, T)
    e = jnp.exp(logits - m)                               # (S, T)
    denom = jnp.sum(e, axis=0, keepdims=True)             # (1, T)

    # EUP approximate reciprocal + one Newton step for ~f32 accuracy.
    inv = pl.reciprocal(denom, approx=True)
    inv = inv * (2.0 - denom * inv)

    o_ref[0] = (e * inv).astype(o_ref.dtype)


def maskrcnn3d_forward(img, params, *, tile_vox=32768, out_dtype=jnp.float32,
                       vmem_budget_bytes=24 * 1024 * 1024):
    """img: (N, C_in, D, H, W) float32 (NCDHW, PyTorch convention).
    params: w1 (C_in, HID), b1 (1, HID), w2 (HID, S), b2 (1, S).
    Returns seg_predict: (N, S, D, H, W), softmax over the channel dim."""
    w1, b1, w2, b2 = params
    N, C_in, D, H, W = img.shape
    hid = w1.shape[1]
    n_cls = w2.shape[1]

    # Keep NCDHW; flatten spatial dims so voxels land on the lane axis.
    V = D * H * W
    x = img.reshape(N, C_in, V)

    # VMEM-aware tile choice: double-buffered in/out blocks plus the f32
    # intermediates (h, logits, e) resident per voxel.
    bytes_per_vox = 4 * (2 * C_in + 2 * n_cls + hid + 2 * n_cls)
    cap = max((vmem_budget_bytes // bytes_per_vox) // 128 * 128, 128)
    tile = min(tile_vox, cap, ((V + 127) // 128) * 128)
    tile = max((tile // 128) * 128, 128)                   # multiple of 128
    num_tiles = pl.cdiv(V, tile)
    needs_mask = (V % tile) != 0                           # ragged last block

    # Kernel-side weight layout: (out, in) matrices and column biases.
    w1t = jnp.transpose(w1)          # (HID, C_in)
    b1c = jnp.transpose(b1)          # (HID, 1)
    w2t = jnp.transpose(w2)          # (S, HID)
    b2c = jnp.transpose(b2)          # (S, 1)

    kernel = functools.partial(_seg_softmax_kernel,
                               v_total=V, tile=tile, needs_mask=needs_mask)

    out_itemsize = jnp.dtype(out_dtype).itemsize
    flops = 2 * N * V * (C_in * hid + hid * n_cls)
    bytes_accessed = (4 * N * V * C_in + out_itemsize * N * V * n_cls
                      + 4 * (C_in * hid + hid + hid * n_cls + n_cls))
    cost = pl.CostEstimate(flops=flops,
                           transcendentals=N * V * (n_cls + 1),
                           bytes_accessed=bytes_accessed)

    weight_bytes = 4 * (hid * C_in + hid + n_cls * hid + n_cls)
    vmem_limit = int(min(48 * 1024 * 1024,
                         max(bytes_per_vox * tile + weight_bytes + (4 << 20),
                             16 * 1024 * 1024)))

    out = pl.pallas_call(
        kernel,
        out_shape=jax.ShapeDtypeStruct((N, n_cls, V), out_dtype),
        grid_spec=pltpu.PrefetchScalarGridSpec(
            num_scalar_prefetch=0,
            # Big (voxel-tile) axis first so the megacore split on v7x is
            # balanced even when N == 1; both axes are fully parallel.
            grid=(num_tiles, N),
            in_specs=[
                pl.BlockSpec((1, C_in, tile), lambda t, n: (n, 0, t)),
                pl.BlockSpec((hid, C_in), lambda t, n: (0, 0)),
                pl.BlockSpec((hid, 1), lambda t, n: (0, 0)),
                pl.BlockSpec((n_cls, hid), lambda t, n: (0, 0)),
                pl.BlockSpec((n_cls, 1), lambda t, n: (0, 0)),
            ],
            out_specs=pl.BlockSpec((1, n_cls, tile), lambda t, n: (n, 0, t)),
        ),
        compiler_params=pltpu.CompilerParams(
            dimension_semantics=("parallel", "parallel"),
            vmem_limit_bytes=vmem_limit),
        cost_estimate=cost,
    )(x, w1t, b1c, w2t, b2c)

    return out.reshape(N, n_cls, D, H, W)


def _reference_forward(img, params):
    """Pure-JAX reference mirroring the PyTorch semantics."""
    w1, b1, w2, b2 = params
    x = jnp.transpose(img, (0, 2, 3, 4, 1))                 # NDHWC
    h = jnp.maximum(jnp.einsum("ndhwc,ck->ndhwk", x, w1) + b1[0], 0.0)
    logits = jnp.einsum("ndhwk,ks->ndhws", h, w2) + b2[0]
    probs = jax.nn.softmax(logits, axis=-1)
    return jnp.transpose(probs, (0, 4, 1, 2, 3))            # NCDHW


if __name__ == "__main__":
    # Small shapes consistent with a 3D segmentation forward pass.
    N, C_in, D, H, W = 2, 4, 8, 16, 16
    HIDDEN, SEG_CLASS = 32, 4

    key = jax.random.PRNGKey(0)
    k_img, k_w1, k_b1, k_w2, k_b2 = jax.random.split(key, 5)

    img = jax.random.normal(k_img, (N, C_in, D, H, W), dtype=jnp.float32)

    # Deterministic synthetic backbone parameters (pointwise 3D conv weights).
    w1 = 0.1 * jax.random.normal(k_w1, (C_in, HIDDEN), dtype=jnp.float32)
    b1 = 0.1 * jax.random.normal(k_b1, (1, HIDDEN), dtype=jnp.float32)
    w2 = 0.1 * jax.random.normal(k_w2, (HIDDEN, SEG_CLASS), dtype=jnp.float32)
    b2 = 0.1 * jax.random.normal(k_b2, (1, SEG_CLASS), dtype=jnp.float32)
    params = (w1, b1, w2, b2)

    out = maskrcnn3d_forward(img, params)
    out = jax.block_until_ready(out)

    ref = jax.block_until_ready(_reference_forward(img, params))
    assert out.shape == (N, SEG_CLASS, D, H, W)
    assert jnp.allclose(out, ref, atol=1e-5, rtol=1e-5)
    # softmax over dim=1 must sum to 1
    assert jnp.allclose(jnp.sum(out, axis=1), 1.0, atol=1e-5)

    # Exercise the ragged-tail (edge-block masking) path with a tile smaller
    # than V that does not divide it, to make sure no pad round-trip is needed.
    out_ragged = jax.block_until_ready(
        maskrcnn3d_forward(img, params, tile_vox=384))
    assert jnp.allclose(out_ragged, ref, atol=1e-5, rtol=1e-5)

    print("KERNEL_OK")
</pallas_src>

<mosaic_0001>
module attributes {stable_mosaic.version = 11 : i64} {
  func.func @_seg_softmax_kernel(%arg0: i32, %arg1: i32, %arg2: memref<1x4x2048xf32, #tpu.memory_space<vmem>>, %arg3: memref<32x4xf32, #tpu.memory_space<vmem>>, %arg4: memref<32x1xf32, #tpu.memory_space<vmem>>, %arg5: memref<4x32xf32, #tpu.memory_space<vmem>>, %arg6: memref<4x1xf32, #tpu.memory_space<vmem>>, %arg7: memref<1x4x2048xf32, #tpu.memory_space<vmem>>) attributes {dimension_semantics = [#tpu.dimension_semantics<parallel>, #tpu.dimension_semantics<parallel>], iteration_bounds = array<i64: 1, 2>, scalar_prefetch = 0 : i64, scratch_operands = 0 : i64, tpu.core_type = #tpu.core_type<tc>, window_params = [{transform_indices = @transform_0, window_bounds = array<i64: 1, 4, 2048>}, {pipeline_mode = #tpu.pipeline_mode<synchronous>, transform_indices = @transform_1, window_bounds = array<i64: 32, 4>}, {pipeline_mode = #tpu.pipeline_mode<synchronous>, transform_indices = @transform_2, window_bounds = array<i64: 32, 1>}, {pipeline_mode = #tpu.pipeline_mode<synchronous>, transform_indices = @transform_3, window_bounds = array<i64: 4, 32>}, {pipeline_mode = #tpu.pipeline_mode<synchronous>, transform_indices = @transform_4, window_bounds = array<i64: 4, 1>}, {transform_indices = @transform_5, window_bounds = array<i64: 1, 4, 2048>}]} {
    %c0 = arith.constant 0 : index
    %c0_0 = arith.constant 0 : index
    %c0_1 = arith.constant 0 : index
    %0 = vector.load %arg2[%c0, %c0_0, %c0_1] : memref<1x4x2048xf32, #tpu.memory_space<vmem>>, vector<1x4x2048xf32>
    %1 = vector.shape_cast %0 : vector<1x4x2048xf32> to vector<4x2048xf32>
    %c0_2 = arith.constant 0 : index
    %c0_3 = arith.constant 0 : index
    %2 = vector.load %arg3[%c0_2, %c0_3] : memref<32x4xf32, #tpu.memory_space<vmem>>, vector<32x4xf32>
    %cst = arith.constant dense<0.000000e+00> : vector<32x2048xf32>
    %3 = tpu.matmul %2, %1, %cst {dimension_numbers = #tpu.dot_dimension_numbers<[1], [0], [0], [1], [0, 0, 1, 1], [], []>} : vector<32x4xf32>, vector<4x2048xf32>, vector<32x2048xf32> -> vector<32x2048xf32>
    %c0_4 = arith.constant 0 : index
    %c0_5 = arith.constant 0 : index
    %4 = vector.load %arg4[%c0_4, %c0_5] : memref<32x1xf32, #tpu.memory_space<vmem>>, vector<32x1xf32>
    %5 = vector.broadcast %4 : vector<32x1xf32> to vector<32x2048xf32>
    %6 = arith.addf %3, %5 : vector<32x2048xf32>
    %cst_6 = arith.constant 0.000000e+00 : f32
    %7 = vector.broadcast %cst_6 : f32 to vector<32x2048xf32>
    %8 = arith.maximumf %6, %7 : vector<32x2048xf32>
    %c0_7 = arith.constant 0 : index
    %c0_8 = arith.constant 0 : index
    %9 = vector.load %arg5[%c0_7, %c0_8] : memref<4x32xf32, #tpu.memory_space<vmem>>, vector<4x32xf32>
    %cst_9 = arith.constant dense<0.000000e+00> : vector<4x2048xf32>
    %10 = tpu.matmul %9, %8, %cst_9 {dimension_numbers = #tpu.dot_dimension_numbers<[1], [0], [0], [1], [0, 0, 1, 1], [], []>} : vector<4x32xf32>, vector<32x2048xf32>, vector<4x2048xf32> -> vector<4x2048xf32>
    %c0_10 = arith.constant 0 : index
    %c0_11 = arith.constant 0 : index
    %11 = vector.load %arg6[%c0_10, %c0_11] : memref<4x1xf32, #tpu.memory_space<vmem>>, vector<4x1xf32>
    %12 = vector.broadcast %11 : vector<4x1xf32> to vector<4x2048xf32>
    %13 = arith.addf %10, %12 : vector<4x2048xf32>
    %cst_12 = arith.constant dense<0xFF800000> : vector<2048xf32>
    %14 = vector.multi_reduction <maximumf>, %13, %cst_12 [0] : vector<4x2048xf32> to vector<2048xf32>
    %15 = vector.shape_cast %14 : vector<2048xf32> to vector<1x2048xf32>
    %16 = vector.broadcast %15 : vector<1x2048xf32> to vector<4x2048xf32>
    %17 = arith.subf %13, %16 : vector<4x2048xf32>
    %18 = math.exp %17 : vector<4x2048xf32>
    %cst_13 = arith.constant dense<0.000000e+00> : vector<2048xf32>
    %19 = vector.multi_reduction <add>, %18, %cst_13 [0] : vector<4x2048xf32> to vector<2048xf32>
    %20 = vector.shape_cast %19 : vector<2048xf32> to vector<1x2048xf32>
    %21 = tpu.reciprocal %20 {approx = true} : vector<1x2048xf32> -> vector<1x2048xf32>
    %22 = arith.mulf %20, %21 : vector<1x2048xf32>
    %cst_14 = arith.constant 2.000000e+00 : f32
    %23 = vector.broadcast %cst_14 : f32 to vector<1x2048xf32>
    %24 = arith.subf %23, %22 : vector<1x2048xf32>
    %25 = arith.mulf %21, %24 : vector<1x2048xf32>
    %26 = vector.broadcast %25 : vector<1x2048xf32> to vector<4x2048xf32>
    %27 = arith.mulf %18, %26 : vector<4x2048xf32>
    %c0_15 = arith.constant 0 : index
    %c0_16 = arith.constant 0 : index
    %c0_17 = arith.constant 0 : index
    %28 = vector.load %arg7[%c0_15, %c0_16, %c0_17] : memref<1x4x2048xf32, #tpu.memory_space<vmem>>, vector<1x4x2048xf32>
    %29 = vector.shape_cast %28 : vector<1x4x2048xf32> to vector<4x2048xf32>
    %30 = vector.shape_cast %27 : vector<4x2048xf32> to vector<1x4x2048xf32>
    tpu.vector_store %arg7[%c0_15, %c0_16, %c0_17], %30 {strides = array<i32>} : memref<1x4x2048xf32, #tpu.memory_space<vmem>>, vector<1x4x2048xf32>,
    return
  }
  func.func @transform_0(%arg0: i32, %arg1: i32) -> (i32, i32, i32) {
    %c0_i32 = arith.constant 0 : i32
    %c0_i32_0 = arith.constant 0 : i32
    return %arg1, %c0_i32, %arg0 : i32, i32, i32
  }
  func.func @transform_1(%arg0: i32, %arg1: i32) -> (i32, i32) {
    %c0_i32 = arith.constant 0 : i32
    %c0_i32_0 = arith.constant 0 : i32
    %c0_i32_1 = arith.constant 0 : i32
    return %c0_i32, %c0_i32_0 : i32, i32
  }
  func.func @transform_2(%arg0: i32, %arg1: i32) -> (i32, i32) {
    %c0_i32 = arith.constant 0 : i32
    %c0_i32_0 = arith.constant 0 : i32
    %c0_i32_1 = arith.constant 0 : i32
    return %c0_i32, %c0_i32_0 : i32, i32
  }
  func.func @transform_3(%arg0: i32, %arg1: i32) -> (i32, i32) {
    %c0_i32 = arith.constant 0 : i32
    %c0_i32_0 = arith.constant 0 : i32
    %c0_i32_1 = arith.constant 0 : i32
    return %c0_i32, %c0_i32_0 : i32, i32
  }
  func.func @transform_4(%arg0: i32, %arg1: i32) -> (i32, i32) {
    %c0_i32 = arith.constant 0 : i32
    %c0_i32_0 = arith.constant 0 : i32
    %c0_i32_1 = arith.constant 0 : i32
    return %c0_i32, %c0_i32_0 : i32, i32
  }
  func.func @transform_5(%arg0: i32, %arg1: i32) -> (i32, i32, i32) {
    %c0_i32 = arith.constant 0 : i32
    %c0_i32_0 = arith.constant 0 : i32
    return %arg1, %c0_i32, %arg0 : i32, i32, i32
  }
}

</mosaic_0001>

<llo_original>
// kernel: tpu_custom_call.1
$region0: #{tpu_custom_call.1}
  #allocation0 [shape = 'u32[]', space=smem, size = 0x4, offset = 0x4, fixed_abs, tag = 'smem constant byte address 0x4 - core index']
  #allocation1 [shape = 'u32[144,128]{1,0:T(1,128)}', space=vmem, size = 0x12000, scoped, tag = 'internal scratch']
  %s0 = inlined_call_operand.hbm [shape: f32[2,4,2048], index: 0, kind: input, shape index: {}]
  %s1 = inlined_call_operand.vmem [shape: f32[32,4], index: 1, kind: input, shape index: {}]
  %s2 = inlined_call_operand.vmem [shape: f32[32,1], index: 2, kind: input, shape index: {}]
  %s3 = inlined_call_operand.vmem [shape: f32[4,32], index: 3, kind: input, shape index: {}]
  %s4 = inlined_call_operand.vmem [shape: f32[4,1], index: 4, kind: input, shape index: {}]
  %s5 = inlined_call_operand.hbm [shape: f32[2,4,2048], index: 5, kind: output, shape index: {}]
  %s6 = sld [smem:[#allocation0]]
  $region57: #{tpu_custom_call.1} parent=0
    _
  %s8 = ssub.s32 1, %s6
  %s9 = scalar_select 0, %s8, %s6
  $region1: #{tpu_custom_call.1} parent=0
    #allocation2 [shape = 'u8[65536]{0}', space=vmem, size = 0x10000, scoped, tag = 'input window, operand 0']
    #allocation3 [shape = 's32[2]{0}', space=sflag, size = 0x8, scoped, tag = 'scoped memory for tpu_custom_call.1']
    #allocation4 [shape = 's32[2]{0}', space=sflag, size = 0x8, scoped, tag = 'scoped memory for tpu_custom_call.1']
    #allocation5 [shape = 'u8[65536]{0}', space=vmem, size = 0x10000, scoped, tag = 'output window, operand 0']
    %10 = vsyncpa [#allocation3], 0
    %s11 = scalar_lea.sflag [#allocation3], 1
    %12 = vsyncpa %s11, 0
    %13 = vsyncpa [#allocation4], 0
    %s14 = scalar_lea.sflag [#allocation4], 1
    %15 = vsyncpa %s14, 0
    loop: start=0, step=1, limit=4
    $region2: #{tpu_custom_call.1} parent=1 // loop_pre_header
      _
    $region3: #{tpu_custom_call.1} parent=1 // loop_header
      %s17 = sphi 0, %s21
      %p18 = scmp.ge.s32.totalorder %s17, 4
      %s24 = sphi 0, %s36
      %s25 = sphi 0, %s32
      %s26 = sphi 0, %s24
      %s27 = sphi 0, %s25
      %s28 = sphi 0, %s26
      %s29 = sphi 0, %s27
      %s41 = sphi 0, %s43
      %s44 = sphi 0, %s41
      %s45 = sphi 0, %s44
      %s61 = sphi 0, %s45
      %s65 = sphi 0, %s65
      %s67 = sphi 0, %s65
      %s68 = sphi 0, %s67
      %s82 = sphi 0, %s68
      %s86 = sphi 0, %s86
      %s88 = sphi 0, %s86
      %s89 = sphi 0, %s88
      %s103 = sphi 0, %s89
      %s107 = sphi 0, %s107
      %s109 = sphi 0, %s107
      %s110 = sphi 0, %s109
      %s124 = sphi 0, %s110
      %s128 = sphi 0, %s128
      %s130 = sphi 0, %s128
      %s131 = sphi 0, %s130
      %s145 = sphi 0, %s131
      %s153 = sphi 0, %s155
      %s156 = sphi 0, %s153
      %s157 = sphi 0, %s156
      %s173 = sphi 0, %s157
    $region4: #{tpu_custom_call.1} parent=1 // loop_header_branch
      %20 = sbr.rel (%p18) target = $region8
    $region5: #{tpu_custom_call.1} parent=1 // loop_body
      %s22 = ssub.s32 %s17, 1
      %s23 = ssub.s32 %s17, 2
      %s30 = sadd.s32 1, %s25
      %p31 = scmp.ge.s32.totalorder %s30, 2
      %s32 = scalar_select %p31, 0, %s30
      %s33 = sadd.s32 1, %s24
      %s34 = scalar_select %p31, %s33, %s24
      %p35 = scmp.ge.s32.totalorder %s34, 1
      %s36 = scalar_select %p35, 0, %s34
      %s37 = ssub.s32 %s25, %s32
      %s38 = ssub.s32 %s24, %s36
      %s39 = sor.u32 %s37, %s38
      %p40 = scmp.eq.s32.totalorder %s39, 0
      %s42 = sadd.s32 %s41, 1
      %s43 = scalar_select %p40, %s41, %s42
      %p46 = pneg %p40
      %p47 = scmp.eq.s32.totalorder %s17, 1
      %p48 = por %p46, %p47
      %p49 = scmp.ne.s32.totalorder %s41, %s44
      %p50 = scmp.eq.s32.totalorder %s17, 0
      %p51 = por %p49, %p50
      %p52 = scmp.ne.s32.totalorder %s41, %s44
      %p53 = scmp.eq.s32.totalorder %s22, 1
      %p54 = por %p52, %p53
      %p55 = scmp.ne.s32.totalorder %s44, %s45
      %p56 = scmp.eq.s32.totalorder %s22, 0
      %p57 = por %p55, %p56
      %p58 = scmp.ne.s32.totalorder %s44, %s45
      %p59 = scmp.eq.s32.totalorder %s23, 1
      %p60 = por %p58, %p59
      %p62 = scmp.ne.s32.totalorder %s45, %s61
      %p63 = scmp.eq.s32.totalorder %s23, 0
      %p64 = por %p62, %p63
      %s66 = sadd.s32 %s65, 1
      %p69 = scmp.eq.s32.totalorder %s17, 1
      %p70 = scmp.ne.s32.totalorder %s65, %s67
      %p71 = scmp.eq.s32.totalorder %s17, 0
      %p72 = por %p70, %p71
      %p73 = scmp.ne.s32.totalorder %s65, %s67
      %p74 = scmp.eq.s32.totalorder %s22, 1
      %p75 = por %p73, %p74
      %p76 = scmp.ne.s32.totalorder %s67, %s68
      %p77 = scmp.eq.s32.totalorder %s22, 0
      %p78 = por %p76, %p77
      %p79 = scmp.ne.s32.totalorder %s67, %s68
      %p80 = scmp.eq.s32.totalorder %s23, 1
      %p81 = por %p79, %p80
      %p83 = scmp.ne.s32.totalorder %s68, %s82
      %p84 = scmp.eq.s32.totalorder %s23, 0
      %p85 = por %p83, %p84
      %s87 = sadd.s32 %s86, 1
      %p90 = scmp.eq.s32.totalorder %s17, 1
      %p91 = scmp.ne.s32.totalorder %s86, %s88
      %p92 = scmp.eq.s32.totalorder %s17, 0
      %p93 = por %p91, %p92
      %p94 = scmp.ne.s32.totalorder %s86, %s88
      %p95 = scmp.eq.s32.totalorder %s22, 1
      %p96 = por %p94, %p95
      %p97 = scmp.ne.s32.totalorder %s88, %s89
      %p98 = scmp.eq.s32.totalorder %s22, 0
      %p99 = por %p97, %p98
      %p100 = scmp.ne.s32.totalorder %s88, %s89
      %p101 = scmp.eq.s32.totalorder %s23, 1
      %p102 = por %p100, %p101
      %p104 = scmp.ne.s32.totalorder %s89, %s103
      %p105 = scmp.eq.s32.totalorder %s23, 0
      %p106 = por %p104, %p105
      %s108 = sadd.s32 %s107, 1
      %p111 = scmp.eq.s32.totalorder %s17, 1
      %p112 = scmp.ne.s32.totalorder %s107, %s109
      %p113 = scmp.eq.s32.totalorder %s17, 0
      %p114 = por %p112, %p113
      %p115 = scmp.ne.s32.totalorder %s107, %s109
      %p116 = scmp.eq.s32.totalorder %s22, 1
      %p117 = por %p115, %p116
      %p118 = scmp.ne.s32.totalorder %s109, %s110
      %p119 = scmp.eq.s32.totalorder %s22, 0
      %p120 = por %p118, %p119
      %p121 = scmp.ne.s32.totalorder %s109, %s110
      %p122 = scmp.eq.s32.totalorder %s23, 1
      %p123 = por %p121, %p122
      %p125 = scmp.ne.s32.totalorder %s110, %s124
      %p126 = scmp.eq.s32.totalorder %s23, 0
      %p127 = por %p125, %p126
      %s129 = sadd.s32 %s128, 1
      %p132 = scmp.eq.s32.totalorder %s17, 1
      %p133 = scmp.ne.s32.totalorder %s128, %s130
      %p134 = scmp.eq.s32.totalorder %s17, 0
      %p135 = por %p133, %p134
      %p136 = scmp.ne.s32.totalorder %s128, %s130
      %p137 = scmp.eq.s32.totalorder %s22, 1
      %p138 = por %p136, %p137
      %p139 = scmp.ne.s32.totalorder %s130, %s131
      %p140 = scmp.eq.s32.totalorder %s22, 0
      %p141 = por %p139, %p140
      %p142 = scmp.ne.s32.totalorder %s130, %s131
      %p143 = scmp.eq.s32.totalorder %s23, 1
      %p144 = por %p142, %p143
      %p146 = scmp.ne.s32.totalorder %s131, %s145
      %p147 = scmp.eq.s32.totalorder %s23, 0
      %p148 = por %p146, %p147
      %s149 = ssub.s32 %s25, %s32
      %s150 = ssub.s32 %s24, %s36
      %s151 = sor.u32 %s149, %s150
      %p152 = scmp.eq.s32.totalorder %s151, 0
      %s154 = sadd.s32 %s153, 1
      %s155 = scalar_select %p152, %s153, %s154
      %p158 = pneg %p152
      %p159 = scmp.eq.s32.totalorder %s17, 1
      %p160 = por %p158, %p159
      %p161 = scmp.ne.s32.totalorder %s153, %s156
      %p162 = scmp.eq.s32.totalorder %s17, 0
      %p163 = por %p161, %p162
      %p164 = scmp.ne.s32.totalorder %s153, %s156
      %p165 = scmp.eq.s32.totalorder %s22, 1
      %p166 = por %p164, %p165
      %p167 = scmp.ne.s32.totalorder %s156, %s157
      %p168 = scmp.eq.s32.totalorder %s22, 0
      %p169 = por %p167, %p168
      %p170 = scmp.ne.s32.totalorder %s156, %s157
      %p171 = scmp.eq.s32.totalorder %s23, 1
      %p172 = por %p170, %p171
      %p174 = scmp.ne.s32.totalorder %s157, %s173
      %p175 = scmp.eq.s32.totalorder %s23, 0
      %p176 = por %p174, %p175
      %p177 = scmp.le.s32.totalorder 1, %s17
      %p178 = scmp.lt.s32.totalorder %s17, 3
      %p179 = pnand %p177, %p178
      %p180 = pneg %p179
      // Predicated region
      $region9: #{tpu_custom_call.1} parent=5 // pred_check
        _
      $region10: #{tpu_custom_call.1} parent=5 // pred_check_branch
        %182 = sbr.rel (%p179) target = $region12
      $region11: #{tpu_custom_call.1} parent=5 // pred_region
        %s183 = ssub.s32 %s17, 1
        // Predicated region
        $region13: #{tpu_custom_call.1} parent=11 // pred_check
          %p184 = pneg %p78
        $region14: #{tpu_custom_call.1} parent=11 // pred_check_branch
          %186 = sbr.rel (%p184) target = $region16
        $region15: #{tpu_custom_call.1} parent=11 // pred_region
          _
        $region16: #{tpu_custom_call.1} parent=11 // pred_fallthru
          _
        // Predicated region
        $region17: #{tpu_custom_call.1} parent=11 // pred_check
          %p187 = pneg %p99
        $region18: #{tpu_custom_call.1} parent=11 // pred_check_branch
          %189 = sbr.rel (%p187) target = $region20
        $region19: #{tpu_custom_call.1} parent=11 // pred_region
          _
        $region20: #{tpu_custom_call.1} parent=11 // pred_fallthru
          _
        // Predicated region
        $region21: #{tpu_custom_call.1} parent=11 // pred_check
          %p190 = pneg %p120
        $region22: #{tpu_custom_call.1} parent=11 // pred_check_branch
          %192 = sbr.rel (%p190) target = $region24
        $region23: #{tpu_custom_call.1} parent=11 // pred_region
          _
        $region24: #{tpu_custom_call.1} parent=11 // pred_fallthru
          _
        // Predicated region
        $region25: #{tpu_custom_call.1} parent=11 // pred_check
          %p193 = pneg %p141
        $region26: #{tpu_custom_call.1} parent=11 // pred_check_branch
          %195 = sbr.rel (%p193) target = $region28
        $region27: #{tpu_custom_call.1} parent=11 // pred_region
          _
        $region28: #{tpu_custom_call.1} parent=11 // pred_fallthru
          _
      $region12: #{tpu_custom_call.1} parent=5 // pred_fallthru
        _
      %p196 = scmp.lt.s32.totalorder %s17, 2
      // Predicated region
      $region29: #{tpu_custom_call.1} parent=5 // pred_check
        %p197 = pneg %p196
      $region30: #{tpu_custom_call.1} parent=5 // pred_check_branch
        %199 = sbr.rel (%p197) target = $region32
      $region31: #{tpu_custom_call.1} parent=5 // pred_region
        // Predicated region
        $region33: #{tpu_custom_call.1} parent=31 // pred_check
          %p200 = pneg %p51
        $region34: #{tpu_custom_call.1} parent=31 // pred_check_branch
          %202 = sbr.rel (%p200) target = $region36
        $region35: #{tpu_custom_call.1} parent=31 // pred_region
          %s203 = sand.u32 %s41, 1
          %s204 = scalar_lea.sflag [#allocation3], %s203
          %s205 = sand.u32 %s41, 1
          %s206 = smul.addr %s205, 64
          %s207 = scalar_lea.vmem [#allocation2], %s206
          %s208 = smul.u32 16, %s24
          %s210 = ssub.s32 1024, 1024
          %211 = vsyncadd %s204, %s210
          %s212 = smul.addr %s25, 16
          %s213 = sadd.s32 %s208, %s212
          %s214 = smul.addr %s213, 64
          %s215 = scalar_lea.hbm %s0, %s214
          %s217 = sshll.u32 %s207, 4
          %s218 = int_to_ptr.vmem [resolvable:$true] %s217
          %220 = dma.hbm_to_vmem [thread:$0]  %s215, 1024, %s218, %s204
        $region36: #{tpu_custom_call.1} parent=31 // pred_fallthru
          _
      $region32: #{tpu_custom_call.1} parent=5 // pred_fallthru
        _
      %p221 = scmp.le.s32.totalorder 1, %s17
      %p222 = scmp.lt.s32.totalorder %s17, 3
      %p223 = pnand %p221, %p222
      %p224 = pneg %p223
      // Predicated region
      $region37: #{tpu_custom_call.1} parent=5 // pred_check
        _
      $region38: #{tpu_custom_call.1} parent=5 // pred_check_branch
        %226 = sbr.rel (%p223) target = $region40
      $region39: #{tpu_custom_call.1} parent=5 // pred_region
        %s227 = ssub.s32 %s17, 1
        %s228 = sand.u32 %s44, 1
        %s229 = scalar_lea.sflag [#allocation3], %s228
        %s230 = sand.u32 %s44, 1
        %s231 = smul.addr %s230, 64
        %s232 = scalar_lea.vmem [#allocation2], %s231
        // Predicated region
        $region41: #{tpu_custom_call.1} parent=39 // pred_check
          %p233 = pneg %p57
        $region42: #{tpu_custom_call.1} parent=39 // pred_check_branch
          %235 = sbr.rel (%p233) target = $region44
        $region43: #{tpu_custom_call.1} parent=39 // pred_region
          %236 = dma.done %s229, 1024
        $region44: #{tpu_custom_call.1} parent=39 // pred_fallthru
          _
        %s237 = sand.u32 %s44, 1
        %s238 = scalar_lea.sflag [#allocation3], %s237
        %s239 = sand.u32 %s44, 1
        %s240 = smul.addr %s239, 64
        %s241 = scalar_lea.vmem [#allocation2], %s240
        %p242 = pneg %p57
        %p243 = pneg %p54
        %p244 = pneg %p78
        %p245 = pneg %p75
        %p246 = pneg %p99
        %p247 = pneg %p96
        %p248 = pneg %p120
        %p249 = pneg %p117
        %p250 = pneg %p141
        %p251 = pneg %p138
        %p252 = pneg %p169
        %p253 = pneg %p166
        %s254 = sand.u32 %s156, 1
        %s255 = scalar_lea.sflag [#allocation4], %s254
        %s256 = sand.u32 %s156, 1
        %s257 = smul.addr %s256, 64
        %s258 = scalar_lea.vmem [#allocation5], %s257
        %s259 = smul.u32 16, %s26
        %s260 = smul.u32 16, %s26
        %v261 = vld [vmem:[%s232] sm:$0xff]
        %v262 = vld [vmem:[%s232 + $0x8] sm:$0xff]
        %v263 = vld [vmem:[%s232 + $0x10] sm:$0xff]
        %v264 = vld [vmem:[%s232 + $0x18] sm:$0xff]
        %v265 = vld [vmem:[%s232 + $0x20] sm:$0xff]
        %v266 = vld [vmem:[%s232 + $0x28] sm:$0xff]
        %v267 = vld [vmem:[%s232 + $0x30] sm:$0xff]
        %v268 = vld [vmem:[%s232 + $0x38] sm:$0xff]
        %v269 = vld [vmem:[%s1] sm:$0xff]
        %v270 = vld [vmem:[%s1 + $0x8] sm:$0xff]
        %v271 = vld [vmem:[%s1 + $0x10] sm:$0xff]
        %v272 = vld [vmem:[%s1 + $0x18] sm:$0xff]
        %v273 = vld [vmem:[%s2] sm:$0xff]
        %v274 = vld [vmem:[%s2 + $0x8] sm:$0xff]
        %v275 = vld [vmem:[%s2 + $0x10] sm:$0xff]
        %v276 = vld [vmem:[%s2 + $0x18] sm:$0xff]
        %278 = vset.pattern.permute.xlu0 0
        %279 = vperm.xlu0 %278, %v273
        %v280 = vpop.permute.xlu0 %279
        %283 = vset.pattern.permute.xlu0 0
        %284 = vperm.xlu0 %283, %v274
        %v285 = vpop.permute.xlu0 %284
        %288 = vset.pattern.permute.xlu0 0
        %289 = vperm.xlu0 %288, %v275
        %v290 = vpop.permute.xlu0 %289
        %293 = vset.pattern.permute.xlu0 0
        %294 = vperm.xlu0 %293, %v276
        %v295 = vpop.permute.xlu0 %294
        %v305 = vcombine.high %v261, %v261
        %v306 = vcombine.high %v262, %v262
        %v307 = vcombine.high %v263, %v263
        %v308 = vcombine.high %v264, %v264
        %v309 = vcombine.high %v265, %v265
        %v310 = vcombine.high %v266, %v266
        %v311 = vcombine.high %v267, %v267
        %v312 = vcombine.high %v268, %v268
        %vm313 = vcmask 31744
        %v315 = vsel %vm313, %v269, 0
        %v318 = vsel %vm313, %v270, 0
        %v321 = vsel %vm313, %v271, 0
        %v324 = vsel %vm313, %v272, 0
        %vm326 = vcmask 1043456
        %v327 = vsel %vm326, %v261, 0
        %v329 = vsel %vm326, %v305, 0
        %v331 = vsel %vm326, %v262, 0
        %v333 = vsel %vm326, %v306, 0
        %v335 = vsel %vm326, %v263, 0
        %v337 = vsel %vm326, %v307, 0
        %v339 = vsel %vm326, %v264, 0
        %v341 = vsel %vm326, %v308, 0
        %v343 = vsel %vm326, %v265, 0
        %v345 = vsel %vm326, %v309, 0
        %v347 = vsel %vm326, %v266, 0
        %v349 = vsel %vm326, %v310, 0
        %v351 = vsel %vm326, %v267, 0
        %v353 = vsel %vm326, %v311, 0
        %v355 = vsel %vm326, %v268, 0
        %v357 = vsel %vm326, %v312, 0
        %359 = vmatprep.subr.mxu0 %v329
        %360 = vmatpush1.msra.mxu0 %v327
        %361 = vmatprep.subr.mxu0 0.0
        %362 = vmatpush1.msra.mxu0 0.0
        %363 = vmatprep.subr.mxu0 0.0
        %364 = vmatpush1.msra.mxu0 0.0
        %365 = vmatprep.subr.mxu0 0.0
        %366 = vmatpush1.msra.mxu0 0.0
        %367 = vmatprep.subr.mxu0 0.0
        %368 = vmatpush1.msra.mxu0 0.0
        %369 = vmatprep.subr.mxu0 0.0
        %370 = vmatpush1.msra.mxu0 0.0
        %371 = vmatprep.subr.mxu0 0.0
        %372 = vmatpush1.msra.mxu0 0.0
        %373 = vmatprep.subr.mxu0 0.0
        %374 = vmatpush1.msra.mxu0 0.0
        %375 = vmatprep.subr.mxu0 0.0
        %376 = vmatpush1.msra.mxu0 0.0
        %377 = vmatprep.subr.mxu0 0.0
        %378 = vmatpush1.msra.mxu0 0.0
        %379 = vmatprep.subr.mxu0 0.0
        %380 = vmatpush1.msra.mxu0 0.0
        %381 = vmatprep.subr.mxu0 0.0
        %382 = vmatpush1.msra.mxu0 0.0
        %383 = vmatprep.subr.mxu0 0.0
        %384 = vmatpush1.msra.mxu0 0.0
        %385 = vmatprep.subr.mxu0 0.0
        %386 = vmatpush1.msra.mxu0 0.0
        %387 = vmatprep.subr.mxu0 0.0
        %388 = vmatpush1.msra.mxu0 0.0
        %389 = vmatprep.subr.mxu0 0.0
        %390 = vmatpush1.msra.mxu0 0.0
        %391 = vmatprep.subr.mxu0 0.0
        %392 = vmatpush1.msra.mxu0 0.0
        %393 = vmatprep.subr.mxu0 0.0
        %394 = vmatpush1.msra.mxu0 0.0
        %395 = vmatprep.subr.mxu0 0.0
        %396 = vmatpush1.msra.mxu0 0.0
        %397 = vmatprep.subr.mxu0 0.0
        %398 = vmatpush1.msra.mxu0 0.0
        %399 = vmatprep.subr.mxu0 0.0
        %400 = vmatpush1.msra.mxu0 0.0
        %401 = vmatprep.subr.mxu0 0.0
        %402 = vmatpush1.msra.mxu0 0.0
        %403 = vmatprep.subr.mxu0 0.0
        %404 = vmatpush1.msra.mxu0 0.0
        %405 = vmatprep.subr.mxu0 0.0
        %406 = vmatpush1.msra.mxu0 0.0
        %407 = vmatprep.subr.mxu0 0.0
        %408 = vmatpush1.msra.mxu0 0.0
        %409 = vmatprep.subr.mxu0 0.0
        %410 = vmatpush1.msra.mxu0 0.0
        %411 = vmatprep.subr.mxu0 0.0
        %412 = vmatpush1.msra.mxu0 0.0
        %413 = vmatprep.subr.mxu0 0.0
        %414 = vmatpush1.msra.mxu0 0.0
        %415 = vmatprep.subr.mxu0 0.0
        %416 = vmatpush1.msra.mxu0 0.0
        %417 = vmatprep.subr.mxu0 0.0
        %418 = vmatpush1.msra.mxu0 0.0
        %419 = vmatprep.subr.mxu0 0.0
        %420 = vmatpush1.msra.mxu0 0.0
        %421 = vmatprep.subr.mxu0 0.0
        %422 = vmatpush1.msra.mxu0 0.0
        %423 = vmatprep.mubr.f32.mxu0 0.0
        %424 = vmatmul.mubr.f32.gmra.mrb[0].mxu0 %v315
        %v425 = vpop.f32.mrb[0].mxu0
        %v426 = vadd.f32 %v280, %v425
        %v427 = vpop.f32.mrb[0].mxu0
        %v428 = vadd.f32 %v280, %v427
        %429 = vmatprep.mubr.f32.mxu0 0.0
        %430 = vmatmul.mubr.f32.gmra.mrb[0].mxu0 %v318
        %v431 = vpop.f32.mrb[0].mxu0
        %v432 = vadd.f32 %v285, %v431
        %v433 = vpop.f32.mrb[0].mxu0
        %v434 = vadd.f32 %v285, %v433
        %435 = vmatprep.mubr.f32.mxu0 0.0
        %436 = vmatmul.mubr.f32.gmra.mrb[0].mxu0 %v321
        %v437 = vpop.f32.mrb[0].mxu0
        %v438 = vadd.f32 %v290, %v437
        %v439 = vpop.f32.mrb[0].mxu0
        %v440 = vadd.f32 %v290, %v439
        %441 = vmatprep.mubr.f32.mxu0 0.0
        %442 = vmatmul.mubr.f32.gmra.mrb[0].mxu0 %v324
        %v443 = vpop.f32.mrb[0].mxu0
        %v444 = vadd.f32 %v295, %v443
        %v445 = vpop.f32.mrb[0].mxu0
        %v446 = vadd.f32 %v295, %v445
        %447 = vdwg.mxu0
        %448 = vmatprep.subr.mxu0 %v333
        %449 = vmatpush1.msra.mxu0 %v331
        %450 = vmatprep.subr.mxu0 0.0
        %451 = vmatpush1.msra.mxu0 0.0
        %452 = vmatprep.subr.mxu0 0.0
        %453 = vmatpush1.msra.mxu0 0.0
        %454 = vmatprep.subr.mxu0 0.0
        %455 = vmatpush1.msra.mxu0 0.0
        %456 = vmatprep.subr.mxu0 0.0
        %457 = vmatpush1.msra.mxu0 0.0
        %458 = vmatprep.subr.mxu0 0.0
        %459 = vmatpush1.msra.mxu0 0.0
        %460 = vmatprep.subr.mxu0 0.0
        %461 = vmatpush1.msra.mxu0 0.0
        %462 = vmatprep.subr.mxu0 0.0
        %463 = vmatpush1.msra.mxu0 0.0
        %464 = vmatprep.subr.mxu0 0.0
        %465 = vmatpush1.msra.mxu0 0.0
        %466 = vmatprep.subr.mxu0 0.0
        %467 = vmatpush1.msra.mxu0 0.0
        %468 = vmatprep.subr.mxu0 0.0
        %469 = vmatpush1.msra.mxu0 0.0
        %470 = vmatprep.subr.mxu0 0.0
        %471 = vmatpush1.msra.mxu0 0.0
        %472 = vmatprep.subr.mxu0 0.0
        %473 = vmatpush1.msra.mxu0 0.0
        %474 = vmatprep.subr.mxu0 0.0
        %475 = vmatpush1.msra.mxu0 0.0
        %476 = vmatprep.subr.mxu0 0.0
        %477 = vmatpush1.msra.mxu0 0.0
        %478 = vmatprep.subr.mxu0 0.0
        %479 = vmatpush1.msra.mxu0 0.0
        %480 = vmatprep.subr.mxu0 0.0
        %481 = vmatpush1.msra.mxu0 0.0
        %482 = vmatprep.subr.mxu0 0.0
        %483 = vmatpush1.msra.mxu0 0.0
        %484 = vmatprep.subr.mxu0 0.0
        %485 = vmatpush1.msra.mxu0 0.0
        %486 = vmatprep.subr.mxu0 0.0
        %487 = vmatpush1.msra.mxu0 0.0
        %488 = vmatprep.subr.mxu0 0.0
        %489 = vmatpush1.msra.mxu0 0.0
        %490 = vmatprep.subr.mxu0 0.0
        %491 = vmatpush1.msra.mxu0 0.0
        %492 = vmatprep.subr.mxu0 0.0
        %493 = vmatpush1.msra.mxu0 0.0
        %494 = vmatprep.subr.mxu0 0.0
        %495 = vmatpush1.msra.mxu0 0.0
        %496 = vmatprep.subr.mxu0 0.0
        %497 = vmatpush1.msra.mxu0 0.0
        %498 = vmatprep.subr.mxu0 0.0
        %499 = vmatpush1.msra.mxu0 0.0
        %500 = vmatprep.subr.mxu0 0.0
        %501 = vmatpush1.msra.mxu0 0.0
        %502 = vmatprep.subr.mxu0 0.0
        %503 = vmatpush1.msra.mxu0 0.0
        %504 = vmatprep.subr.mxu0 0.0
        %505 = vmatpush1.msra.mxu0 0.0
        %506 = vmatprep.subr.mxu0 0.0
        %507 = vmatpush1.msra.mxu0 0.0
        %508 = vmatprep.subr.mxu0 0.0
        %509 = vmatpush1.msra.mxu0 0.0
        %510 = vmatprep.subr.mxu0 0.0
        %511 = vmatpush1.msra.mxu0 0.0
        %512 = vmatprep.mubr.f32.mxu0 0.0
        %513 = vmatmul.mubr.f32.gmra.mrb[0].mxu0 %v315
        %v514 = vpop.f32.mrb[0].mxu0
        %v515 = vadd.f32 %v280, %v514
        %v516 = vpop.f32.mrb[0].mxu0
        %v517 = vadd.f32 %v280, %v516
        %518 = vmatprep.mubr.f32.mxu0 0.0
        %519 = vmatmul.mubr.f32.gmra.mrb[0].mxu0 %v318
        %v520 = vpop.f32.mrb[0].mxu0
        %v521 = vadd.f32 %v285, %v520
        %v522 = vpop.f32.mrb[0].mxu0
        %v523 = vadd.f32 %v285, %v522
        %524 = vmatprep.mubr.f32.mxu0 0.0
        %525 = vmatmul.mubr.f32.gmra.mrb[0].mxu0 %v321
        %v526 = vpop.f32.mrb[0].mxu0
        %v527 = vadd.f32 %v290, %v526
        %v528 = vpop.f32.mrb[0].mxu0
        %v529 = vadd.f32 %v290, %v528
        %530 = vmatprep.mubr.f32.mxu0 0.0
        %531 = vmatmul.mubr.f32.gmra.mrb[0].mxu0 %v324
        %v532 = vpop.f32.mrb[0].mxu0
        %v533 = vadd.f32 %v295, %v532
        %v534 = vpop.f32.mrb[0].mxu0
        %v535 = vadd.f32 %v295, %v534
        %536 = vdwg.mxu0
        %537 = vmatprep.subr.mxu0 %v337
        %538 = vmatpush1.msra.mxu0 %v335
        %539 = vmatprep.subr.mxu0 0.0
        %540 = vmatpush1.msra.mxu0 0.0
        %541 = vmatprep.subr.mxu0 0.0
        %542 = vmatpush1.msra.mxu0 0.0
        %543 = vmatprep.subr.mxu0 0.0
        %544 = vmatpush1.msra.mxu0 0.0
        %545 = vmatprep.subr.mxu0 0.0
        %546 = vmatpush1.msra.mxu0 0.0
        %547 = vmatprep.subr.mxu0 0.0
        %548 = vmatpush1.msra.mxu0 0.0
        %549 = vmatprep.subr.mxu0 0.0
        %550 = vmatpush1.msra.mxu0 0.0
        %551 = vmatprep.subr.mxu0 0.0
        %552 = vmatpush1.msra.mxu0 0.0
        %553 = vmatprep.subr.mxu0 0.0
        %554 = vmatpush1.msra.mxu0 0.0
        %555 = vmatprep.subr.mxu0 0.0
        %556 = vmatpush1.msra.mxu0 0.0
        %557 = vmatprep.subr.mxu0 0.0
        %558 = vmatpush1.msra.mxu0 0.0
        %559 = vmatprep.subr.mxu0 0.0
        %560 = vmatpush1.msra.mxu0 0.0
        %561 = vmatprep.subr.mxu0 0.0
        %562 = vmatpush1.msra.mxu0 0.0
        %563 = vmatprep.subr.mxu0 0.0
        %564 = vmatpush1.msra.mxu0 0.0
        %565 = vmatprep.subr.mxu0 0.0
        %566 = vmatpush1.msra.mxu0 0.0
        %567 = vmatprep.subr.mxu0 0.0
        %568 = vmatpush1.msra.mxu0 0.0
        %569 = vmatprep.subr.mxu0 0.0
        %570 = vmatpush1.msra.mxu0 0.0
        %571 = vmatprep.subr.mxu0 0.0
        %572 = vmatpush1.msra.mxu0 0.0
        %573 = vmatprep.subr.mxu0 0.0
        %574 = vmatpush1.msra.mxu0 0.0
        %575 = vmatprep.subr.mxu0 0.0
        %576 = vmatpush1.msra.mxu0 0.0
        %577 = vmatprep.subr.mxu0 0.0
        %578 = vmatpush1.msra.mxu0 0.0
        %579 = vmatprep.subr.mxu0 0.0
        %580 = vmatpush1.msra.mxu0 0.0
        %581 = vmatprep.subr.mxu0 0.0
        %582 = vmatpush1.msra.mxu0 0.0
        %583 = vmatprep.subr.mxu0 0.0
        %584 = vmatpush1.msra.mxu0 0.0
        %585 = vmatprep.subr.mxu0 0.0
        %586 = vmatpush1.msra.mxu0 0.0
        %587 = vmatprep.subr.mxu0 0.0
        %588 = vmatpush1.msra.mxu0 0.0
        %589 = vmatprep.subr.mxu0 0.0
        %590 = vmatpush1.msra.mxu0 0.0
        %591 = vmatprep.subr.mxu0 0.0
        %592 = vmatpush1.msra.mxu0 0.0
        %593 = vmatprep.subr.mxu0 0.0
        %594 = vmatpush1.msra.mxu0 0.0
        %595 = vmatprep.subr.mxu0 0.0
        %596 = vmatpush1.msra.mxu0 0.0
        %597 = vmatprep.subr.mxu0 0.0
        %598 = vmatpush1.msra.mxu0 0.0
        %599 = vmatprep.subr.mxu0 0.0
        %600 = vmatpush1.msra.mxu0 0.0
        %601 = vmatprep.mubr.f32.mxu0 0.0
        %602 = vmatmul.mubr.f32.gmra.mrb[0].mxu0 %v315
        %v603 = vpop.f32.mrb[0].mxu0
        %v604 = vadd.f32 %v280, %v603
        %v605 = vpop.f32.mrb[0].mxu0
        %v606 = vadd.f32 %v280, %v605
        %607 = vmatprep.mubr.f32.mxu0 0.0
        %608 = vmatmul.mubr.f32.gmra.mrb[0].mxu0 %v318
        %v609 = vpop.f32.mrb[0].mxu0
        %v610 = vadd.f32 %v285, %v609
        %v611 = vpop.f32.mrb[0].mxu0
        %v612 = vadd.f32 %v285, %v611
        %613 = vmatprep.mubr.f32.mxu0 0.0
        %614 = vmatmul.mubr.f32.gmra.mrb[0].mxu0 %v321
        %v615 = vpop.f32.mrb[0].mxu0
        %v616 = vadd.f32 %v290, %v615
        %v617 = vpop.f32.mrb[0].mxu0
        %v618 = vadd.f32 %v290, %v617
        %619 = vmatprep.mubr.f32.mxu0 0.0
        %620 = vmatmul.mubr.f32.gmra.mrb[0].mxu0 %v324
        %v621 = vpop.f32.mrb[0].mxu0
        %v622 = vadd.f32 %v295, %v621
        %v623 = vpop.f32.mrb[0].mxu0
        %v624 = vadd.f32 %v295, %v623
        %625 = vdwg.mxu0
        %626 = vmatprep.subr.mxu0 %v341
        %627 = vmatpush1.msra.mxu0 %v339
        %628 = vmatprep.subr.mxu0 0.0
        %629 = vmatpush1.msra.mxu0 0.0
        %630 = vmatprep.subr.mxu0 0.0
        %631 = vmatpush1.msra.mxu0 0.0
        %632 = vmatprep.subr.mxu0 0.0
        %633 = vmatpush1.msra.mxu0 0.0
        %634 = vmatprep.subr.mxu0 0.0
        %635 = vmatpush1.msra.mxu0 0.0
        %636 = vmatprep.subr.mxu0 0.0
        %637 = vmatpush1.msra.mxu0 0.0
        %638 = vmatprep.subr.mxu0 0.0
        %639 = vmatpush1.msra.mxu0 0.0
        %640 = vmatprep.subr.mxu0 0.0
        %641 = vmatpush1.msra.mxu0 0.0
        %642 = vmatprep.subr.mxu0 0.0
        %643 = vmatpush1.msra.mxu0 0.0
        %644 = vmatprep.subr.mxu0 0.0
        %645 = vmatpush1.msra.mxu0 0.0
        %646 = vmatprep.subr.mxu0 0.0
        %647 = vmatpush1.msra.mxu0 0.0
        %648 = vmatprep.subr.mxu0 0.0
        %649 = vmatpush1.msra.mxu0 0.0
        %650 = vmatprep.subr.mxu0 0.0
        %651 = vmatpush1.msra.mxu0 0.0
        %652 = vmatprep.subr.mxu0 0.0
        %653 = vmatpush1.msra.mxu0 0.0
        %654 = vmatprep.subr.mxu0 0.0
        %655 = vmatpush1.msra.mxu0 0.0
        %656 = vmatprep.subr.mxu0 0.0
        %657 = vmatpush1.msra.mxu0 0.0
        %658 = vmatprep.subr.mxu0 0.0
        %659 = vmatpush1.msra.mxu0 0.0
        %660 = vmatprep.subr.mxu0 0.0
        %661 = vmatpush1.msra.mxu0 0.0
        %662 = vmatprep.subr.mxu0 0.0
        %663 = vmatpush1.msra.mxu0 0.0
        %664 = vmatprep.subr.mxu0 0.0
        %665 = vmatpush1.msra.mxu0 0.0
        %666 = vmatprep.subr.mxu0 0.0
        %667 = vmatpush1.msra.mxu0 0.0
        %668 = vmatprep.subr.mxu0 0.0
        %669 = vmatpush1.msra.mxu0 0.0
        %670 = vmatprep.subr.mxu0 0.0
        %671 = vmatpush1.msra.mxu0 0.0
        %672 = vmatprep.subr.mxu0 0.0
        %673 = vmatpush1.msra.mxu0 0.0
        %674 = vmatprep.subr.mxu0 0.0
        %675 = vmatpush1.msra.mxu0 0.0
        %676 = vmatprep.subr.mxu0 0.0
        %677 = vmatpush1.msra.mxu0 0.0
        %678 = vmatprep.subr.mxu0 0.0
        %679 = vmatpush1.msra.mxu0 0.0
        %680 = vmatprep.subr.mxu0 0.0
        %681 = vmatpush1.msra.mxu0 0.0
        %682 = vmatprep.subr.mxu0 0.0
        %683 = vmatpush1.msra.mxu0 0.0
        %684 = vmatprep.subr.mxu0 0.0
        %685 = vmatpush1.msra.mxu0 0.0
        %686 = vmatprep.subr.mxu0 0.0
        %687 = vmatpush1.msra.mxu0 0.0
        %688 = vmatprep.subr.mxu0 0.0
        %689 = vmatpush1.msra.mxu0 0.0
        %690 = vmatprep.mubr.f32.mxu0 0.0
        %691 = vmatmul.mubr.f32.gmra.mrb[0].mxu0 %v315
        %v692 = vpop.f32.mrb[0].mxu0
        %v693 = vadd.f32 %v280, %v692
        %v694 = vpop.f32.mrb[0].mxu0
        %v695 = vadd.f32 %v280, %v694
        %696 = vmatprep.mubr.f32.mxu0 0.0
        %697 = vmatmul.mubr.f32.gmra.mrb[0].mxu0 %v318
        %v698 = vpop.f32.mrb[0].mxu0
        %v699 = vadd.f32 %v285, %v698
        %v700 = vpop.f32.mrb[0].mxu0
        %v701 = vadd.f32 %v285, %v700
        %702 = vmatprep.mubr.f32.mxu0 0.0
        %703 = vmatmul.mubr.f32.gmra.mrb[0].mxu0 %v321
        %v704 = vpop.f32.mrb[0].mxu0
        %v705 = vadd.f32 %v290, %v704
        %v706 = vpop.f32.mrb[0].mxu0
        %v707 = vadd.f32 %v290, %v706
        %708 = vmatprep.mubr.f32.mxu0 0.0
        %709 = vmatmul.mubr.f32.gmra.mrb[0].mxu0 %v324
        %v710 = vpop.f32.mrb[0].mxu0
        %v711 = vadd.f32 %v295, %v710
        %v712 = vpop.f32.mrb[0].mxu0
        %v713 = vadd.f32 %v295, %v712
        %714 = vdwg.mxu0
        %715 = vmatprep.subr.mxu0 %v345
        %716 = vmatpush1.msra.mxu0 %v343
        %717 = vmatprep.subr.mxu0 0.0
        %718 = vmatpush1.msra.mxu0 0.0
        %719 = vmatprep.subr.mxu0 0.0
        %720 = vmatpush1.msra.mxu0 0.0
        %721 = vmatprep.subr.mxu0 0.0
        %722 = vmatpush1.msra.mxu0 0.0
        %723 = vmatprep.subr.mxu0 0.0
        %724 = vmatpush1.msra.mxu0 0.0
        %725 = vmatprep.subr.mxu0 0.0
        %726 = vmatpush1.msra.mxu0 0.0
        %727 = vmatprep.subr.mxu0 0.0
        %728 = vmatpush1.msra.mxu0 0.0
        %729 = vmatprep.subr.mxu0 0.0
        %730 = vmatpush1.msra.mxu0 0.0
        %731 = vmatprep.subr.mxu0 0.0
        %732 = vmatpush1.msra.mxu0 0.0
        %733 = vmatprep.subr.mxu0 0.0
        %734 = vmatpush1.msra.mxu0 0.0
        %735 = vmatprep.subr.mxu0 0.0
        %736 = vmatpush1.msra.mxu0 0.0
        %737 = vmatprep.subr.mxu0 0.0
        %738 = vmatpush1.msra.mxu0 0.0
        %739 = vmatprep.subr.mxu0 0.0
        %740 = vmatpush1.msra.mxu0 0.0
        %741 = vmatprep.subr.mxu0 0.0
        %742 = vmatpush1.msra.mxu0 0.0
        %743 = vmatprep.subr.mxu0 0.0
        %744 = vmatpush1.msra.mxu0 0.0
        %745 = vmatprep.subr.mxu0 0.0
        %746 = vmatpush1.msra.mxu0 0.0
        %747 = vmatprep.subr.mxu0 0.0
        %748 = vmatpush1.msra.mxu0 0.0
        %749 = vmatprep.subr.mxu0 0.0
        %750 = vmatpush1.msra.mxu0 0.0
        %751 = vmatprep.subr.mxu0 0.0
        %752 = vmatpush1.msra.mxu0 0.0
        %753 = vmatprep.subr.mxu0 0.0
        %754 = vmatpush1.msra.mxu0 0.0
        %755 = vmatprep.subr.mxu0 0.0
        %756 = vmatpush1.msra.mxu0 0.0
        %757 = vmatprep.subr.mxu0 0.0
        %758 = vmatpush1.msra.mxu0 0.0
        %759 = vmatprep.subr.mxu0 0.0
        %760 = vmatpush1.msra.mxu0 0.0
        %761 = vmatprep.subr.mxu0 0.0
        %762 = vmatpush1.msra.mxu0 0.0
        %763 = vmatprep.subr.mxu0 0.0
        %764 = vmatpush1.msra.mxu0 0.0
        %765 = vmatprep.subr.mxu0 0.0
        %766 = vmatpush1.msra.mxu0 0.0
        %767 = vmatprep.subr.mxu0 0.0
        %768 = vmatpush1.msra.mxu0 0.0
        %769 = vmatprep.subr.mxu0 0.0
        %770 = vmatpush1.msra.mxu0 0.0
        %771 = vmatprep.subr.mxu0 0.0
        %772 = vmatpush1.msra.mxu0 0.0
        %773 = vmatprep.subr.mxu0 0.0
        %774 = vmatpush1.msra.mxu0 0.0
        %775 = vmatprep.subr.mxu0 0.0
        %776 = vmatpush1.msra.mxu0 0.0
        %777 = vmatprep.subr.mxu0 0.0
        %778 = vmatpush1.msra.mxu0 0.0
        %779 = vmatprep.mubr.f32.mxu0 0.0
        %780 = vmatmul.mubr.f32.gmra.mrb[0].mxu0 %v315
        %v781 = vpop.f32.mrb[0].mxu0
        %v782 = vadd.f32 %v280, %v781
        %v783 = vpop.f32.mrb[0].mxu0
        %v784 = vadd.f32 %v280, %v783
        %785 = vmatprep.mubr.f32.mxu0 0.0
        %786 = vmatmul.mubr.f32.gmra.mrb[0].mxu0 %v318
        %v787 = vpop.f32.mrb[0].mxu0
        %v788 = vadd.f32 %v285, %v787
        %v789 = vpop.f32.mrb[0].mxu0
        %v790 = vadd.f32 %v285, %v789
        %791 = vmatprep.mubr.f32.mxu0 0.0
        %792 = vmatmul.mubr.f32.gmra.mrb[0].mxu0 %v321
        %v793 = vpop.f32.mrb[0].mxu0
        %v794 = vadd.f32 %v290, %v793
        %v795 = vpop.f32.mrb[0].mxu0
        %v796 = vadd.f32 %v290, %v795
        %797 = vmatprep.mubr.f32.mxu0 0.0
        %798 = vmatmul.mubr.f32.gmra.mrb[0].mxu0 %v324
        %v799 = vpop.f32.mrb[0].mxu0
        %v800 = vadd.f32 %v295, %v799
        %v801 = vpop.f32.mrb[0].mxu0
        %v802 = vadd.f32 %v295, %v801
        %803 = vdwg.mxu0
        %804 = vmatprep.subr.mxu0 %v349
        %805 = vmatpush1.msra.mxu0 %v347
        %806 = vmatprep.subr.mxu0 0.0
        %807 = vmatpush1.msra.mxu0 0.0
        %808 = vmatprep.subr.mxu0 0.0
        %809 = vmatpush1.msra.mxu0 0.0
        %810 = vmatprep.subr.mxu0 0.0
        %811 = vmatpush1.msra.mxu0 0.0
        %812 = vmatprep.subr.mxu0 0.0
        %813 = vmatpush1.msra.mxu0 0.0
        %814 = vmatprep.subr.mxu0 0.0
        %815 = vmatpush1.msra.mxu0 0.0
        %816 = vmatprep.subr.mxu0 0.0
        %817 = vmatpush1.msra.mxu0 0.0
        %818 = vmatprep.subr.mxu0 0.0
        %819 = vmatpush1.msra.mxu0 0.0
        %820 = vmatprep.subr.mxu0 0.0
        %821 = vmatpush1.msra.mxu0 0.0
        %822 = vmatprep.subr.mxu0 0.0
        %823 = vmatpush1.msra.mxu0 0.0
        %824 = vmatprep.subr.mxu0 0.0
        %825 = vmatpush1.msra.mxu0 0.0
        %826 = vmatprep.subr.mxu0 0.0
        %827 = vmatpush1.msra.mxu0 0.0
        %828 = vmatprep.subr.mxu0 0.0
        %829 = vmatpush1.msra.mxu0 0.0
        %830 = vmatprep.subr.mxu0 0.0
        %831 = vmatpush1.msra.mxu0 0.0
        %832 = vmatprep.subr.mxu0 0.0
        %833 = vmatpush1.msra.mxu0 0.0
        %834 = vmatprep.subr.mxu0 0.0
        %835 = vmatpush1.msra.mxu0 0.0
        %836 = vmatprep.subr.mxu0 0.0
        %837 = vmatpush1.msra.mxu0 0.0
        %838 = vmatprep.subr.mxu0 0.0
        %839 = vmatpush1.msra.mxu0 0.0
        %840 = vmatprep.subr.mxu0 0.0
        %841 = vmatpush1.msra.mxu0 0.0
        %842 = vmatprep.subr.mxu0 0.0
        %843 = vmatpush1.msra.mxu0 0.0
        %844 = vmatprep.subr.mxu0 0.0
        %845 = vmatpush1.msra.mxu0 0.0
        %846 = vmatprep.subr.mxu0 0.0
        %847 = vmatpush1.msra.mxu0 0.0
        %848 = vmatprep.subr.mxu0 0.0
        %849 = vmatpush1.msra.mxu0 0.0
        %850 = vmatprep.subr.mxu0 0.0
        %851 = vmatpush1.msra.mxu0 0.0
        %852 = vmatprep.subr.mxu0 0.0
        %853 = vmatpush1.msra.mxu0 0.0
        %854 = vmatprep.subr.mxu0 0.0
        %855 = vmatpush1.msra.mxu0 0.0
        %856 = vmatprep.subr.mxu0 0.0
        %857 = vmatpush1.msra.mxu0 0.0
        %858 = vmatprep.subr.mxu0 0.0
        %859 = vmatpush1.msra.mxu0 0.0
        %860 = vmatprep.subr.mxu0 0.0
        %861 = vmatpush1.msra.mxu0 0.0
        %862 = vmatprep.subr.mxu0 0.0
        %863 = vmatpush1.msra.mxu0 0.0
        %864 = vmatprep.subr.mxu0 0.0
        %865 = vmatpush1.msra.mxu0 0.0
        %866 = vmatprep.subr.mxu0 0.0
        %867 = vmatpush1.msra.mxu0 0.0
        %868 = vmatprep.mubr.f32.mxu0 0.0
        %869 = vmatmul.mubr.f32.gmra.mrb[0].mxu0 %v315
        %v870 = vpop.f32.mrb[0].mxu0
        %v871 = vadd.f32 %v280, %v870
        %v872 = vpop.f32.mrb[0].mxu0
        %v873 = vadd.f32 %v280, %v872
        %874 = vmatprep.mubr.f32.mxu0 0.0
        %875 = vmatmul.mubr.f32.gmra.mrb[0].mxu0 %v318
        %v876 = vpop.f32.mrb[0].mxu0
        %v877 = vadd.f32 %v285, %v876
        %v878 = vpop.f32.mrb[0].mxu0
        %v879 = vadd.f32 %v285, %v878
        %880 = vmatprep.mubr.f32.mxu0 0.0
        %881 = vmatmul.mubr.f32.gmra.mrb[0].mxu0 %v321
        %v882 = vpop.f32.mrb[0].mxu0
        %v883 = vadd.f32 %v290, %v882
        %v884 = vpop.f32.mrb[0].mxu0
        %v885 = vadd.f32 %v290, %v884
        %886 = vmatprep.mubr.f32.mxu0 0.0
        %887 = vmatmul.mubr.f32.gmra.mrb[0].mxu0 %v324
        %v888 = vpop.f32.mrb[0].mxu0
        %v889 = vadd.f32 %v295, %v888
        %v890 = vpop.f32.mrb[0].mxu0
        %v891 = vadd.f32 %v295, %v890
        %892 = vdwg.mxu0
        %893 = vmatprep.subr.mxu0 %v353
        %894 = vmatpush1.msra.mxu0 %v351
        %895 = vmatprep.subr.mxu0 0.0
        %896 = vmatpush1.msra.mxu0 0.0
        %897 = vmatprep.subr.mxu0 0.0
        %898 = vmatpush1.msra.mxu0 0.0
        %899 = vmatprep.subr.mxu0 0.0
        %900 = vmatpush1.msra.mxu0 0.0
        %901 = vmatprep.subr.mxu0 0.0
        %902 = vmatpush1.msra.mxu0 0.0
        %903 = vmatprep.subr.mxu0 0.0
        %904 = vmatpush1.msra.mxu0 0.0
        %905 = vmatprep.subr.mxu0 0.0
        %906 = vmatpush1.msra.mxu0 0.0
        %907 = vmatprep.subr.mxu0 0.0
        %908 = vmatpush1.msra.mxu0 0.0
        %909 = vmatprep.subr.mxu0 0.0
        %910 = vmatpush1.msra.mxu0 0.0
        %911 = vmatprep.subr.mxu0 0.0
        %912 = vmatpush1.msra.mxu0 0.0
        %913 = vmatprep.subr.mxu0 0.0
        %914 = vmatpush1.msra.mxu0 0.0
        %915 = vmatprep.subr.mxu0 0.0
        %916 = vmatpush1.msra.mxu0 0.0
        %917 = vmatprep.subr.mxu0 0.0
        %918 = vmatpush1.msra.mxu0 0.0
        %919 = vmatprep.subr.mxu0 0.0
        %920 = vmatpush1.msra.mxu0 0.0
        %921 = vmatprep.subr.mxu0 0.0
        %922 = vmatpush1.msra.mxu0 0.0
        %923 = vmatprep.subr.mxu0 0.0
        %924 = vmatpush1.msra.mxu0 0.0
        %925 = vmatprep.subr.mxu0 0.0
        %926 = vmatpush1.msra.mxu0 0.0
        %927 = vmatprep.subr.mxu0 0.0
        %928 = vmatpush1.msra.mxu0 0.0
        %929 = vmatprep.subr.mxu0 0.0
        %930 = vmatpush1.msra.mxu0 0.0
        %931 = vmatprep.subr.mxu0 0.0
        %932 = vmatpush1.msra.mxu0 0.0
        %933 = vmatprep.subr.mxu0 0.0
        %934 = vmatpush1.msra.mxu0 0.0
        %935 = vmatprep.subr.mxu0 0.0
        %936 = vmatpush1.msra.mxu0 0.0
        %937 = vmatprep.subr.mxu0 0.0
        %938 = vmatpush1.msra.mxu0 0.0
        %939 = vmatprep.subr.mxu0 0.0
        %940 = vmatpush1.msra.mxu0 0.0
        %941 = vmatprep.subr.mxu0 0.0
        %942 = vmatpush1.msra.mxu0 0.0
        %943 = vmatprep.subr.mxu0 0.0
        %944 = vmatpush1.msra.mxu0 0.0
        %945 = vmatprep.subr.mxu0 0.0
        %946 = vmatpush1.msra.mxu0 0.0
        %947 = vmatprep.subr.mxu0 0.0
        %948 = vmatpush1.msra.mxu0 0.0
        %949 = vmatprep.subr.mxu0 0.0
        %950 = vmatpush1.msra.mxu0 0.0
        %951 = vmatprep.subr.mxu0 0.0
        %952 = vmatpush1.msra.mxu0 0.0
        %953 = vmatprep.subr.mxu0 0.0
        %954 = vmatpush1.msra.mxu0 0.0
        %955 = vmatprep.subr.mxu0 0.0
        %956 = vmatpush1.msra.mxu0 0.0
        %957 = vmatprep.mubr.f32.mxu0 0.0
        %958 = vmatmul.mubr.f32.gmra.mrb[0].mxu0 %v315
        %v959 = vpop.f32.mrb[0].mxu0
        %v960 = vadd.f32 %v280, %v959
        %v961 = vpop.f32.mrb[0].mxu0
        %v962 = vadd.f32 %v280, %v961
        %963 = vmatprep.mubr.f32.mxu0 0.0
        %964 = vmatmul.mubr.f32.gmra.mrb[0].mxu0 %v318
        %v965 = vpop.f32.mrb[0].mxu0
        %v966 = vadd.f32 %v285, %v965
        %v967 = vpop.f32.mrb[0].mxu0
        %v968 = vadd.f32 %v285, %v967
        %969 = vmatprep.mubr.f32.mxu0 0.0
        %970 = vmatmul.mubr.f32.gmra.mrb[0].mxu0 %v321
        %v971 = vpop.f32.mrb[0].mxu0
        %v972 = vadd.f32 %v290, %v971
        %v973 = vpop.f32.mrb[0].mxu0
        %v974 = vadd.f32 %v290, %v973
        %975 = vmatprep.mubr.f32.mxu0 0.0
        %976 = vmatmul.mubr.f32.gmra.mrb[0].mxu0 %v324
        %v977 = vpop.f32.mrb[0].mxu0
        %v978 = vadd.f32 %v295, %v977
        %v979 = vpop.f32.mrb[0].mxu0
        %v980 = vadd.f32 %v295, %v979
        %981 = vdwg.mxu0
        %982 = vmatprep.subr.mxu0 %v357
        %983 = vmatpush1.msra.mxu0 %v355
        %984 = vmatprep.subr.mxu0 0.0
        %985 = vmatpush1.msra.mxu0 0.0
        %986 = vmatprep.subr.mxu0 0.0
        %987 = vmatpush1.msra.mxu0 0.0
        %988 = vmatprep.subr.mxu0 0.0
        %989 = vmatpush1.msra.mxu0 0.0
        %990 = vmatprep.subr.mxu0 0.0
        %991 = vmatpush1.msra.mxu0 0.0
        %992 = vmatprep.subr.mxu0 0.0
        %993 = vmatpush1.msra.mxu0 0.0
        %994 = vmatprep.subr.mxu0 0.0
        %995 = vmatpush1.msra.mxu0 0.0
        %996 = vmatprep.subr.mxu0 0.0
        %997 = vmatpush1.msra.mxu0 0.0
        %998 = vmatprep.subr.mxu0 0.0
        %999 = vmatpush1.msra.mxu0 0.0
        %1000 = vmatprep.subr.mxu0 0.0
        %1001 = vmatpush1.msra.mxu0 0.0
        %1002 = vmatprep.subr.mxu0 0.0
        %1003 = vmatpush1.msra.mxu0 0.0
        %1004 = vmatprep.subr.mxu0 0.0
        %1005 = vmatpush1.msra.mxu0 0.0
        %1006 = vmatprep.subr.mxu0 0.0
        %1007 = vmatpush1.msra.mxu0 0.0
        %1008 = vmatprep.subr.mxu0 0.0
        %1009 = vmatpush1.msra.mxu0 0.0
        %1010 = vmatprep.subr.mxu0 0.0
        %1011 = vmatpush1.msra.mxu0 0.0
        %1012 = vmatprep.subr.mxu0 0.0
        %1013 = vmatpush1.msra.mxu0 0.0
        %1014 = vmatprep.subr.mxu0 0.0
        %1015 = vmatpush1.msra.mxu0 0.0
        %1016 = vmatprep.subr.mxu0 0.0
        %1017 = vmatpush1.msra.mxu0 0.0
        %1018 = vmatprep.subr.mxu0 0.0
        %1019 = vmatpush1.msra.mxu0 0.0
        %1020 = vmatprep.subr.mxu0 0.0
        %1021 = vmatpush1.msra.mxu0 0.0
        %1022 = vmatprep.subr.mxu0 0.0
        %1023 = vmatpush1.msra.mxu0 0.0
        %1024 = vmatprep.subr.mxu0 0.0
        %1025 = vmatpush1.msra.mxu0 0.0
        %1026 = vmatprep.subr.mxu0 0.0
        %1027 = vmatpush1.msra.mxu0 0.0
        %1028 = vmatprep.subr.mxu0 0.0
        %1029 = vmatpush1.msra.mxu0 0.0
        %1030 = vmatprep.subr.mxu0 0.0
        %1031 = vmatpush1.msra.mxu0 0.0
        %1032 = vmatprep.subr.mxu0 0.0
        %1033 = vmatpush1.msra.mxu0 0.0
        %1034 = vmatprep.subr.mxu0 0.0
        %1035 = vmatpush1.msra.mxu0 0.0
        %1036 = vmatprep.subr.mxu0 0.0
        %1037 = vmatpush1.msra.mxu0 0.0
        %1038 = vmatprep.subr.mxu0 0.0
        %1039 = vmatpush1.msra.mxu0 0.0
        %1040 = vmatprep.subr.mxu0 0.0
        %1041 = vmatpush1.msra.mxu0 0.0
        %1042 = vmatprep.subr.mxu0 0.0
        %1043 = vmatpush1.msra.mxu0 0.0
        %1044 = vmatprep.subr.mxu0 0.0
        %1045 = vmatpush1.msra.mxu0 0.0
        %1046 = vmatprep.mubr.f32.mxu0 0.0
        %1047 = vmatmul.mubr.f32.gmra.mrb[0].mxu0 %v315
        %v1048 = vpop.f32.mrb[0].mxu0
        %v1049 = vadd.f32 %v280, %v1048
        %v1050 = vpop.f32.mrb[0].mxu0
        %v1051 = vadd.f32 %v280, %v1050
        %1052 = vmatprep.mubr.f32.mxu0 0.0
        %1053 = vmatmul.mubr.f32.gmra.mrb[0].mxu0 %v318
        %v1054 = vpop.f32.mrb[0].mxu0
        %v1055 = vadd.f32 %v285, %v1054
        %v1056 = vpop.f32.mrb[0].mxu0
        %v1057 = vadd.f32 %v285, %v1056
        %1058 = vmatprep.mubr.f32.mxu0 0.0
        %1059 = vmatmul.mubr.f32.gmra.mrb[0].mxu0 %v321
        %v1060 = vpop.f32.mrb[0].mxu0
        %v1061 = vadd.f32 %v290, %v1060
        %v1062 = vpop.f32.mrb[0].mxu0
        %v1063 = vadd.f32 %v290, %v1062
        %1064 = vmatprep.mubr.f32.mxu0 0.0
        %1065 = vmatmul.mubr.f32.gmra.mrb[0].mxu0 %v324
        %v1066 = vpop.f32.mrb[0].mxu0
        %v1067 = vadd.f32 %v295, %v1066
        %v1068 = vpop.f32.mrb[0].mxu0
        %v1069 = vadd.f32 %v295, %v1068
        %1070 = vdwg.mxu0
        %v1071 = vmax.f32 %v426, 0.0
        %v1072 = vmax.f32 %v428, 0.0
        %v1073 = vmax.f32 %v515, 0.0
        %v1074 = vmax.f32 %v517, 0.0
        %v1075 = vmax.f32 %v604, 0.0
        %v1076 = vmax.f32 %v606, 0.0
        %v1077 = vmax.f32 %v693, 0.0
        %v1078 = vmax.f32 %v695, 0.0
        %v1079 = vmax.f32 %v782, 0.0
        %v1080 = vmax.f32 %v784, 0.0
        %v1081 = vmax.f32 %v871, 0.0
        %v1082 = vmax.f32 %v873, 0.0
        %v1083 = vmax.f32 %v960, 0.0
        %v1084 = vmax.f32 %v962, 0.0
        %v1085 = vmax.f32 %v1049, 0.0
        %v1086 = vmax.f32 %v1051, 0.0
        %v1087 = vmax.f32 %v432, 0.0
        %v1088 = vmax.f32 %v434, 0.0
        %v1089 = vmax.f32 %v521, 0.0
        %v1090 = vmax.f32 %v523, 0.0
        %v1091 = vmax.f32 %v610, 0.0
        %v1092 = vmax.f32 %v612, 0.0
        %v1093 = vmax.f32 %v699, 0.0
        %v1094 = vmax.f32 %v701, 0.0
        %v1095 = vmax.f32 %v788, 0.0
        %v1096 = vmax.f32 %v790, 0.0
        %v1097 = vmax.f32 %v877, 0.0
        %v1098 = vmax.f32 %v879, 0.0
        %v1099 = vmax.f32 %v966, 0.0
        %v1100 = vmax.f32 %v968, 0.0
        %v1101 = vmax.f32 %v1055, 0.0
        %v1102 = vmax.f32 %v1057, 0.0
        %v1103 = vmax.f32 %v438, 0.0
        %v1104 = vmax.f32 %v440, 0.0
        %v1105 = vmax.f32 %v527, 0.0
        %v1106 = vmax.f32 %v529, 0.0
        %v1107 = vmax.f32 %v616, 0.0
        %v1108 = vmax.f32 %v618, 0.0
        %v1109 = vmax.f32 %v705, 0.0
        %v1110 = vmax.f32 %v707, 0.0
        %v1111 = vmax.f32 %v794, 0.0
        %v1112 = vmax.f32 %v796, 0.0
        %v1113 = vmax.f32 %v883, 0.0
        %v1114 = vmax.f32 %v885, 0.0
        %v1115 = vmax.f32 %v972, 0.0
        %v1116 = vmax.f32 %v974, 0.0
        %v1117 = vmax.f32 %v1061, 0.0
        %v1118 = vmax.f32 %v1063, 0.0
        %v1119 = vmax.f32 %v444, 0.0
        %v1120 = vmax.f32 %v446, 0.0
        %v1121 = vmax.f32 %v533, 0.0
        %v1122 = vmax.f32 %v535, 0.0
        %v1123 = vmax.f32 %v622, 0.0
        %v1124 = vmax.f32 %v624, 0.0
        %v1125 = vmax.f32 %v711, 0.0
        %v1126 = vmax.f32 %v713, 0.0
        %v1127 = vmax.f32 %v800, 0.0
        %v1128 = vmax.f32 %v802, 0.0
        %v1129 = vmax.f32 %v889, 0.0
        %v1130 = vmax.f32 %v891, 0.0
        %v1131 = vmax.f32 %v978, 0.0
        %v1132 = vmax.f32 %v980, 0.0
        %v1133 = vmax.f32 %v1067, 0.0
        %v1134 = vmax.f32 %v1069, 0.0
        %v1135 = vld [vmem:[%s3] sm:$0xf]
        %v1136 = vld [vmem:[%s4] sm:$0xf]
        %1138 = vset.pattern.permute.xlu0 0
        %1139 = vperm.xlu0 %1138, %v1136
        %v1140 = vpop.permute.xlu0 %1139
        %vm1142 = vcmask 261120
        %v1144 = vsel %vm1142, %v1135, 0
        %1146 = vmatprep.subr.mxu0 %v1072
        %1147 = vmatpush1.msra.mxu0 %v1071
        %1148 = vmatprep.subr.mxu0 %v1088
        %1149 = vmatpush1.msra.mxu0 %v1087
        %1150 = vmatprep.subr.mxu0 %v1104
        %1151 = vmatpush1.msra.mxu0 %v1103
        %1152 = vmatprep.subr.mxu0 %v1120
        %1153 = vmatpush1.msra.mxu0 %v1119
        %1154 = vmatprep.subr.mxu0 0.0
        %1155 = vmatpush1.msra.mxu0 0.0
        %1156 = vmatprep.subr.mxu0 0.0
        %1157 = vmatpush1.msra.mxu0 0.0
        %1158 = vmatprep.subr.mxu0 0.0
        %1159 = vmatpush1.msra.mxu0 0.0
        %1160 = vmatprep.subr.mxu0 0.0
        %1161 = vmatpush1.msra.mxu0 0.0
        %1162 = vmatprep.subr.mxu0 0.0
        %1163 = vmatpush1.msra.mxu0 0.0
        %1164 = vmatprep.subr.mxu0 0.0
        %1165 = vmatpush1.msra.mxu0 0.0
        %1166 = vmatprep.subr.mxu0 0.0
        %1167 = vmatpush1.msra.mxu0 0.0
        %1168 = vmatprep.subr.mxu0 0.0
        %1169 = vmatpush1.msra.mxu0 0.0
        %1170 = vmatprep.subr.mxu0 0.0
        %1171 = vmatpush1.msra.mxu0 0.0
        %1172 = vmatprep.subr.mxu0 0.0
        %1173 = vmatpush1.msra.mxu0 0.0
        %1174 = vmatprep.subr.mxu0 0.0
        %1175 = vmatpush1.msra.mxu0 0.0
        %1176 = vmatprep.subr.mxu0 0.0
        %1177 = vmatpush1.msra.mxu0 0.0
        %1178 = vmatprep.subr.mxu0 0.0
        %1179 = vmatpush1.msra.mxu0 0.0
        %1180 = vmatprep.subr.mxu0 0.0
        %1181 = vmatpush1.msra.mxu0 0.0
        %1182 = vmatprep.subr.mxu0 0.0
        %1183 = vmatpush1.msra.mxu0 0.0
        %1184 = vmatprep.subr.mxu0 0.0
        %1185 = vmatpush1.msra.mxu0 0.0
        %1186 = vmatprep.subr.mxu0 0.0
        %1187 = vmatpush1.msra.mxu0 0.0
        %1188 = vmatprep.subr.mxu0 0.0
        %1189 = vmatpush1.msra.mxu0 0.0
        %1190 = vmatprep.subr.mxu0 0.0
        %1191 = vmatpush1.msra.mxu0 0.0
        %1192 = vmatprep.subr.mxu0 0.0
        %1193 = vmatpush1.msra.mxu0 0.0
        %1194 = vmatprep.subr.mxu0 0.0
        %1195 = vmatpush1.msra.mxu0 0.0
        %1196 = vmatprep.subr.mxu0 0.0
        %1197 = vmatpush1.msra.mxu0 0.0
        %1198 = vmatprep.subr.mxu0 0.0
        %1199 = vmatpush1.msra.mxu0 0.0
        %1200 = vmatprep.subr.mxu0 0.0
        %1201 = vmatpush1.msra.mxu0 0.0
        %1202 = vmatprep.subr.mxu0 0.0
        %1203 = vmatpush1.msra.mxu0 0.0
        %1204 = vmatprep.subr.mxu0 0.0
        %1205 = vmatpush1.msra.mxu0 0.0
        %1206 = vmatprep.subr.mxu0 0.0
        %1207 = vmatpush1.msra.mxu0 0.0
        %1208 = vmatprep.subr.mxu0 0.0
        %1209 = vmatpush1.msra.mxu0 0.0
        %1210 = vmatprep.mubr.f32.mxu0 0.0
        %1211 = vmatmul.mubr.f32.gmra.mrb[0].mxu0 %v1144
        %v1212 = vpop.f32.mrb[0].mxu0
        %v1213 = vadd.f32 %v1140, %v1212
        %v1214 = vpop.f32.mrb[0].mxu0
        %v1215 = vadd.f32 %v1140, %v1214
        %1216 = vdwg.mxu0
        %1217 = vmatprep.subr.mxu0 %v1074
        %1218 = vmatpush1.msra.mxu0 %v1073
        %1219 = vmatprep.subr.mxu0 %v1090
        %1220 = vmatpush1.msra.mxu0 %v1089
        %1221 = vmatprep.subr.mxu0 %v1106
        %1222 = vmatpush1.msra.mxu0 %v1105
        %1223 = vmatprep.subr.mxu0 %v1122
        %1224 = vmatpush1.msra.mxu0 %v1121
        %1225 = vmatprep.subr.mxu0 0.0
        %1226 = vmatpush1.msra.mxu0 0.0
        %1227 = vmatprep.subr.mxu0 0.0
        %1228 = vmatpush1.msra.mxu0 0.0
        %1229 = vmatprep.subr.mxu0 0.0
        %1230 = vmatpush1.msra.mxu0 0.0
        %1231 = vmatprep.subr.mxu0 0.0
        %1232 = vmatpush1.msra.mxu0 0.0
        %1233 = vmatprep.subr.mxu0 0.0
        %1234 = vmatpush1.msra.mxu0 0.0
        %1235 = vmatprep.subr.mxu0 0.0
        %1236 = vmatpush1.msra.mxu0 0.0
        %1237 = vmatprep.subr.mxu0 0.0
        %1238 = vmatpush1.msra.mxu0 0.0
        %1239 = vmatprep.subr.mxu0 0.0
        %1240 = vmatpush1.msra.mxu0 0.0
        %1241 = vmatprep.subr.mxu0 0.0
        %1242 = vmatpush1.msra.mxu0 0.0
        %1243 = vmatprep.subr.mxu0 0.0
        %1244 = vmatpush1.msra.mxu0 0.0
        %1245 = vmatprep.subr.mxu0 0.0
        %1246 = vmatpush1.msra.mxu0 0.0
        %1247 = vmatprep.subr.mxu0 0.0
        %1248 = vmatpush1.msra.mxu0 0.0
        %1249 = vmatprep.subr.mxu0 0.0
        %1250 = vmatpush1.msra.mxu0 0.0
        %1251 = vmatprep.subr.mxu0 0.0
        %1252 = vmatpush1.msra.mxu0 0.0
        %1253 = vmatprep.subr.mxu0 0.0
        %1254 = vmatpush1.msra.mxu0 0.0
        %1255 = vmatprep.subr.mxu0 0.0
        %1256 = vmatpush1.msra.mxu0 0.0
        %1257 = vmatprep.subr.mxu0 0.0
        %1258 = vmatpush1.msra.mxu0 0.0
        %1259 = vmatprep.subr.mxu0 0.0
        %1260 = vmatpush1.msra.mxu0 0.0
        %1261 = vmatprep.subr.mxu0 0.0
        %1262 = vmatpush1.msra.mxu0 0.0
        %1263 = vmatprep.subr.mxu0 0.0
        %1264 = vmatpush1.msra.mxu0 0.0
        %1265 = vmatprep.subr.mxu0 0.0
        %1266 = vmatpush1.msra.mxu0 0.0
        %1267 = vmatprep.subr.mxu0 0.0
        %1268 = vmatpush1.msra.mxu0 0.0
        %1269 = vmatprep.subr.mxu0 0.0
        %1270 = vmatpush1.msra.mxu0 0.0
        %1271 = vmatprep.subr.mxu0 0.0
        %1272 = vmatpush1.msra.mxu0 0.0
        %1273 = vmatprep.subr.mxu0 0.0
        %1274 = vmatpush1.msra.mxu0 0.0
        %1275 = vmatprep.subr.mxu0 0.0
        %1276 = vmatpush1.msra.mxu0 0.0
        %1277 = vmatprep.subr.mxu0 0.0
        %1278 = vmatpush1.msra.mxu0 0.0
        %1279 = vmatprep.subr.mxu0 0.0
        %1280 = vmatpush1.msra.mxu0 0.0
        %1281 = vmatprep.mubr.f32.mxu0 0.0
        %1282 = vmatmul.mubr.f32.gmra.mrb[0].mxu0 %v1144
        %v1283 = vpop.f32.mrb[0].mxu0
        %v1284 = vadd.f32 %v1140, %v1283
        %v1285 = vpop.f32.mrb[0].mxu0
        %v1286 = vadd.f32 %v1140, %v1285
        %1287 = vdwg.mxu0
        %1288 = vmatprep.subr.mxu0 %v1076
        %1289 = vmatpush1.msra.mxu0 %v1075
        %1290 = vmatprep.subr.mxu0 %v1092
        %1291 = vmatpush1.msra.mxu0 %v1091
        %1292 = vmatprep.subr.mxu0 %v1108
        %1293 = vmatpush1.msra.mxu0 %v1107
        %1294 = vmatprep.subr.mxu0 %v1124
        %1295 = vmatpush1.msra.mxu0 %v1123
        %1296 = vmatprep.subr.mxu0 0.0
        %1297 = vmatpush1.msra.mxu0 0.0
        %1298 = vmatprep.subr.mxu0 0.0
        %1299 = vmatpush1.msra.mxu0 0.0
        %1300 = vmatprep.subr.mxu0 0.0
        %1301 = vmatpush1.msra.mxu0 0.0
        %1302 = vmatprep.subr.mxu0 0.0
        %1303 = vmatpush1.msra.mxu0 0.0
        %1304 = vmatprep.subr.mxu0 0.0
        %1305 = vmatpush1.msra.mxu0 0.0
        %1306 = vmatprep.subr.mxu0 0.0
        %1307 = vmatpush1.msra.mxu0 0.0
        %1308 = vmatprep.subr.mxu0 0.0
        %1309 = vmatpush1.msra.mxu0 0.0
        %1310 = vmatprep.subr.mxu0 0.0
        %1311 = vmatpush1.msra.mxu0 0.0
        %1312 = vmatprep.subr.mxu0 0.0
        %1313 = vmatpush1.msra.mxu0 0.0
        %1314 = vmatprep.subr.mxu0 0.0
        %1315 = vmatpush1.msra.mxu0 0.0
        %1316 = vmatprep.subr.mxu0 0.0
        %1317 = vmatpush1.msra.mxu0 0.0
        %1318 = vmatprep.subr.mxu0 0.0
        %1319 = vmatpush1.msra.mxu0 0.0
        %1320 = vmatprep.subr.mxu0 0.0
        %1321 = vmatpush1.msra.mxu0 0.0
        %1322 = vmatprep.subr.mxu0 0.0
        %1323 = vmatpush1.msra.mxu0 0.0
        %1324 = vmatprep.subr.mxu0 0.0
        %1325 = vmatpush1.msra.mxu0 0.0
        %1326 = vmatprep.subr.mxu0 0.0
        %1327 = vmatpush1.msra.mxu0 0.0
        %1328 = vmatprep.subr.mxu0 0.0
        %1329 = vmatpush1.msra.mxu0 0.0
        %1330 = vmatprep.subr.mxu0 0.0
        %1331 = vmatpush1.msra.mxu0 0.0
        %1332 = vmatprep.subr.mxu0 0.0
        %1333 = vmatpush1.msra.mxu0 0.0
        %1334 = vmatprep.subr.mxu0 0.0
        %1335 = vmatpush1.msra.mxu0 0.0
        %1336 = vmatprep.subr.mxu0 0.0
        %1337 = vmatpush1.msra.mxu0 0.0
        %1338 = vmatprep.subr.mxu0 0.0
        %1339 = vmatpush1.msra.mxu0 0.0
        %1340 = vmatprep.subr.mxu0 0.0
        %1341 = vmatpush1.msra.mxu0 0.0
        %1342 = vmatprep.subr.mxu0 0.0
        %1343 = vmatpush1.msra.mxu0 0.0
        %1344 = vmatprep.subr.mxu0 0.0
        %1345 = vmatpush1.msra.mxu0 0.0
        %1346 = vmatprep.subr.mxu0 0.0
        %1347 = vmatpush1.msra.mxu0 0.0
        %1348 = vmatprep.subr.mxu0 0.0
        %1349 = vmatpush1.msra.mxu0 0.0
        %1350 = vmatprep.subr.mxu0 0.0
        %1351 = vmatpush1.msra.mxu0 0.0
        %1352 = vmatprep.mubr.f32.mxu0 0.0
        %1353 = vmatmul.mubr.f32.gmra.mrb[0].mxu0 %v1144
        %v1354 = vpop.f32.mrb[0].mxu0
        %v1355 = vadd.f32 %v1140, %v1354
        %v1356 = vpop.f32.mrb[0].mxu0
        %v1357 = vadd.f32 %v1140, %v1356
        %1358 = vdwg.mxu0
        %1359 = vmatprep.subr.mxu0 %v1078
        %1360 = vmatpush1.msra.mxu0 %v1077
        %1361 = vmatprep.subr.mxu0 %v1094
        %1362 = vmatpush1.msra.mxu0 %v1093
        %1363 = vmatprep.subr.mxu0 %v1110
        %1364 = vmatpush1.msra.mxu0 %v1109
        %1365 = vmatprep.subr.mxu0 %v1126
        %1366 = vmatpush1.msra.mxu0 %v1125
        %1367 = vmatprep.subr.mxu0 0.0
        %1368 = vmatpush1.msra.mxu0 0.0
        %1369 = vmatprep.subr.mxu0 0.0
        %1370 = vmatpush1.msra.mxu0 0.0
        %1371 = vmatprep.subr.mxu0 0.0
        %1372 = vmatpush1.msra.mxu0 0.0
        %1373 = vmatprep.subr.mxu0 0.0
        %1374 = vmatpush1.msra.mxu0 0.0
        %1375 = vmatprep.subr.mxu0 0.0
        %1376 = vmatpush1.msra.mxu0 0.0
        %1377 = vmatprep.subr.mxu0 0.0
        %1378 = vmatpush1.msra.mxu0 0.0
        %1379 = vmatprep.subr.mxu0 0.0
        %1380 = vmatpush1.msra.mxu0 0.0
        %1381 = vmatprep.subr.mxu0 0.0
        %1382 = vmatpush1.msra.mxu0 0.0
        %1383 = vmatprep.subr.mxu0 0.0
        %1384 = vmatpush1.msra.mxu0 0.0
        %1385 = vmatprep.subr.mxu0 0.0
        %1386 = vmatpush1.msra.mxu0 0.0
        %1387 = vmatprep.subr.mxu0 0.0
        %1388 = vmatpush1.msra.mxu0 0.0
        %1389 = vmatprep.subr.mxu0 0.0
        %1390 = vmatpush1.msra.mxu0 0.0
        %1391 = vmatprep.subr.mxu0 0.0
        %1392 = vmatpush1.msra.mxu0 0.0
        %1393 = vmatprep.subr.mxu0 0.0
        %1394 = vmatpush1.msra.mxu0 0.0
        %1395 = vmatprep.subr.mxu0 0.0
        %1396 = vmatpush1.msra.mxu0 0.0
        %1397 = vmatprep.subr.mxu0 0.0
        %1398 = vmatpush1.msra.mxu0 0.0
        %1399 = vmatprep.subr.mxu0 0.0
        %1400 = vmatpush1.msra.mxu0 0.0
        %1401 = vmatprep.subr.mxu0 0.0
        %1402 = vmatpush1.msra.mxu0 0.0
        %1403 = vmatprep.subr.mxu0 0.0
        %1404 = vmatpush1.msra.mxu0 0.0
        %1405 = vmatprep.subr.mxu0 0.0
        %1406 = vmatpush1.msra.mxu0 0.0
        %1407 = vmatprep.subr.mxu0 0.0
        %1408 = vmatpush1.msra.mxu0 0.0
        %1409 = vmatprep.subr.mxu0 0.0
        %1410 = vmatpush1.msra.mxu0 0.0
        %1411 = vmatprep.subr.mxu0 0.0
        %1412 = vmatpush1.msra.mxu0 0.0
        %1413 = vmatprep.subr.mxu0 0.0
        %1414 = vmatpush1.msra.mxu0 0.0
        %1415 = vmatprep.subr.mxu0 0.0
        %1416 = vmatpush1.msra.mxu0 0.0
        %1417 = vmatprep.subr.mxu0 0.0
        %1418 = vmatpush1.msra.mxu0 0.0
        %1419 = vmatprep.subr.mxu0 0.0
        %1420 = vmatpush1.msra.mxu0 0.0
        %1421 = vmatprep.subr.mxu0 0.0
        %1422 = vmatpush1.msra.mxu0 0.0
        %1423 = vmatprep.mubr.f32.mxu0 0.0
        %1424 = vmatmul.mubr.f32.gmra.mrb[0].mxu0 %v1144
        %v1425 = vpop.f32.mrb[0].mxu0
        %v1426 = vadd.f32 %v1140, %v1425
        %v1427 = vpop.f32.mrb[0].mxu0
        %v1428 = vadd.f32 %v1140, %v1427
        %1429 = vdwg.mxu0
        %1430 = vmatprep.subr.mxu0 %v1080
        %1431 = vmatpush1.msra.mxu0 %v1079
        %1432 = vmatprep.subr.mxu0 %v1096
        %1433 = vmatpush1.msra.mxu0 %v1095
        %1434 = vmatprep.subr.mxu0 %v1112
        %1435 = vmatpush1.msra.mxu0 %v1111
        %1436 = vmatprep.subr.mxu0 %v1128
        %1437 = vmatpush1.msra.mxu0 %v1127
        %1438 = vmatprep.subr.mxu0 0.0
        %1439 = vmatpush1.msra.mxu0 0.0
        %1440 = vmatprep.subr.mxu0 0.0
        %1441 = vmatpush1.msra.mxu0 0.0
        %1442 = vmatprep.subr.mxu0 0.0
        %1443 = vmatpush1.msra.mxu0 0.0
        %1444 = vmatprep.subr.mxu0 0.0
        %1445 = vmatpush1.msra.mxu0 0.0
        %1446 = vmatprep.subr.mxu0 0.0
        %1447 = vmatpush1.msra.mxu0 0.0
        %1448 = vmatprep.subr.mxu0 0.0
        %1449 = vmatpush1.msra.mxu0 0.0
        %1450 = vmatprep.subr.mxu0 0.0
        %1451 = vmatpush1.msra.mxu0 0.0
        %1452 = vmatprep.subr.mxu0 0.0
        %1453 = vmatpush1.msra.mxu0 0.0
        %1454 = vmatprep.subr.mxu0 0.0
        %1455 = vmatpush1.msra.mxu0 0.0
        %1456 = vmatprep.subr.mxu0 0.0
        %1457 = vmatpush1.msra.mxu0 0.0
        %1458 = vmatprep.subr.mxu0 0.0
        %1459 = vmatpush1.msra.mxu0 0.0
        %1460 = vmatprep.subr.mxu0 0.0
        %1461 = vmatpush1.msra.mxu0 0.0
        %1462 = vmatprep.subr.mxu0 0.0
        %1463 = vmatpush1.msra.mxu0 0.0
        %1464 = vmatprep.subr.mxu0 0.0
        %1465 = vmatpush1.msra.mxu0 0.0
        %1466 = vmatprep.subr.mxu0 0.0
        %1467 = vmatpush1.msra.mxu0 0.0
        %1468 = vmatprep.subr.mxu0 0.0
        %1469 = vmatpush1.msra.mxu0 0.0
        %1470 = vmatprep.subr.mxu0 0.0
        %1471 = vmatpush1.msra.mxu0 0.0
        %1472 = vmatprep.subr.mxu0 0.0
        %1473 = vmatpush1.msra.mxu0 0.0
        %1474 = vmatprep.subr.mxu0 0.0
        %1475 = vmatpush1.msra.mxu0 0.0
        %1476 = vmatprep.subr.mxu0 0.0
        %1477 = vmatpush1.msra.mxu0 0.0
        %1478 = vmatprep.subr.mxu0 0.0
        %1479 = vmatpush1.msra.mxu0 0.0
        %1480 = vmatprep.subr.mxu0 0.0
        %1481 = vmatpush1.msra.mxu0 0.0
        %1482 = vmatprep.subr.mxu0 0.0
        %1483 = vmatpush1.msra.mxu0 0.0
        %1484 = vmatprep.subr.mxu0 0.0
        %1485 = vmatpush1.msra.mxu0 0.0
        %1486 = vmatprep.subr.mxu0 0.0
        %1487 = vmatpush1.msra.mxu0 0.0
        %1488 = vmatprep.subr.mxu0 0.0
        %1489 = vmatpush1.msra.mxu0 0.0
        %1490 = vmatprep.subr.mxu0 0.0
        %1491 = vmatpush1.msra.mxu0 0.0
        %1492 = vmatprep.subr.mxu0 0.0
        %1493 = vmatpush1.msra.mxu0 0.0
        %1494 = vmatprep.mubr.f32.mxu0 0.0
        %1495 = vmatmul.mubr.f32.gmra.mrb[0].mxu0 %v1144
        %v1496 = vpop.f32.mrb[0].mxu0
        %v1497 = vadd.f32 %v1140, %v1496
        %v1498 = vpop.f32.mrb[0].mxu0
        %v1499 = vadd.f32 %v1140, %v1498
        %1500 = vdwg.mxu0
        %1501 = vmatprep.subr.mxu0 %v1082
        %1502 = vmatpush1.msra.mxu0 %v1081
        %1503 = vmatprep.subr.mxu0 %v1098
        %1504 = vmatpush1.msra.mxu0 %v1097
        %1505 = vmatprep.subr.mxu0 %v1114
        %1506 = vmatpush1.msra.mxu0 %v1113
        %1507 = vmatprep.subr.mxu0 %v1130
        %1508 = vmatpush1.msra.mxu0 %v1129
        %1509 = vmatprep.subr.mxu0 0.0
        %1510 = vmatpush1.msra.mxu0 0.0
        %1511 = vmatprep.subr.mxu0 0.0
        %1512 = vmatpush1.msra.mxu0 0.0
        %1513 = vmatprep.subr.mxu0 0.0
        %1514 = vmatpush1.msra.mxu0 0.0
        %1515 = vmatprep.subr.mxu0 0.0
        %1516 = vmatpush1.msra.mxu0 0.0
        %1517 = vmatprep.subr.mxu0 0.0
        %1518 = vmatpush1.msra.mxu0 0.0
        %1519 = vmatprep.subr.mxu0 0.0
        %1520 = vmatpush1.msra.mxu0 0.0
        %1521 = vmatprep.subr.mxu0 0.0
        %1522 = vmatpush1.msra.mxu0 0.0
        %1523 = vmatprep.subr.mxu0 0.0
        %1524 = vmatpush1.msra.mxu0 0.0
        %1525 = vmatprep.subr.mxu0 0.0
        %1526 = vmatpush1.msra.mxu0 0.0
        %1527 = vmatprep.subr.mxu0 0.0
        %1528 = vmatpush1.msra.mxu0 0.0
        %1529 = vmatprep.subr.mxu0 0.0
        %1530 = vmatpush1.msra.mxu0 0.0
        %1531 = vmatprep.subr.mxu0 0.0
        %1532 = vmatpush1.msra.mxu0 0.0
        %1533 = vmatprep.subr.mxu0 0.0
        %1534 = vmatpush1.msra.mxu0 0.0
        %1535 = vmatprep.subr.mxu0 0.0
        %1536 = vmatpush1.msra.mxu0 0.0
        %1537 = vmatprep.subr.mxu0 0.0
        %1538 = vmatpush1.msra.mxu0 0.0
        %1539 = vmatprep.subr.mxu0 0.0
        %1540 = vmatpush1.msra.mxu0 0.0
        %1541 = vmatprep.subr.mxu0 0.0
        %1542 = vmatpush1.msra.mxu0 0.0
        %1543 = vmatprep.subr.mxu0 0.0
        %1544 = vmatpush1.msra.mxu0 0.0
        %1545 = vmatprep.subr.mxu0 0.0
        %1546 = vmatpush1.msra.mxu0 0.0
        %1547 = vmatprep.subr.mxu0 0.0
        %1548 = vmatpush1.msra.mxu0 0.0
        %1549 = vmatprep.subr.mxu0 0.0
        %1550 = vmatpush1.msra.mxu0 0.0
        %1551 = vmatprep.subr.mxu0 0.0
        %1552 = vmatpush1.msra.mxu0 0.0
        %1553 = vmatprep.subr.mxu0 0.0
        %1554 = vmatpush1.msra.mxu0 0.0
        %1555 = vmatprep.subr.mxu0 0.0
        %1556 = vmatpush1.msra.mxu0 0.0
        %1557 = vmatprep.subr.mxu0 0.0
        %1558 = vmatpush1.msra.mxu0 0.0
        %1559 = vmatprep.subr.mxu0 0.0
        %1560 = vmatpush1.msra.mxu0 0.0
        %1561 = vmatprep.subr.mxu0 0.0
        %1562 = vmatpush1.msra.mxu0 0.0
        %1563 = vmatprep.subr.mxu0 0.0
        %1564 = vmatpush1.msra.mxu0 0.0
        %1565 = vmatprep.mubr.f32.mxu0 0.0
        %1566 = vmatmul.mubr.f32.gmra.mrb[0].mxu0 %v1144
        %v1567 = vpop.f32.mrb[0].mxu0
        %v1568 = vadd.f32 %v1140, %v1567
        %v1569 = vpop.f32.mrb[0].mxu0
        %v1570 = vadd.f32 %v1140, %v1569
        %1571 = vdwg.mxu0
        %1572 = vmatprep.subr.mxu0 %v1084
        %1573 = vmatpush1.msra.mxu0 %v1083
        %1574 = vmatprep.subr.mxu0 %v1100
        %1575 = vmatpush1.msra.mxu0 %v1099
        %1576 = vmatprep.subr.mxu0 %v1116
        %1577 = vmatpush1.msra.mxu0 %v1115
        %1578 = vmatprep.subr.mxu0 %v1132
        %1579 = vmatpush1.msra.mxu0 %v1131
        %1580 = vmatprep.subr.mxu0 0.0
        %1581 = vmatpush1.msra.mxu0 0.0
        %1582 = vmatprep.subr.mxu0 0.0
        %1583 = vmatpush1.msra.mxu0 0.0
        %1584 = vmatprep.subr.mxu0 0.0
        %1585 = vmatpush1.msra.mxu0 0.0
        %1586 = vmatprep.subr.mxu0 0.0
        %1587 = vmatpush1.msra.mxu0 0.0
        %1588 = vmatprep.subr.mxu0 0.0
        %1589 = vmatpush1.msra.mxu0 0.0
        %1590 = vmatprep.subr.mxu0 0.0
        %1591 = vmatpush1.msra.mxu0 0.0
        %1592 = vmatprep.subr.mxu0 0.0
        %1593 = vmatpush1.msra.mxu0 0.0
        %1594 = vmatprep.subr.mxu0 0.0
        %1595 = vmatpush1.msra.mxu0 0.0
        %1596 = vmatprep.subr.mxu0 0.0
        %1597 = vmatpush1.msra.mxu0 0.0
        %1598 = vmatprep.subr.mxu0 0.0
        %1599 = vmatpush1.msra.mxu0 0.0
        %1600 = vmatprep.subr.mxu0 0.0
        %1601 = vmatpush1.msra.mxu0 0.0
        %1602 = vmatprep.subr.mxu0 0.0
        %1603 = vmatpush1.msra.mxu0 0.0
        %1604 = vmatprep.subr.mxu0 0.0
        %1605 = vmatpush1.msra.mxu0 0.0
        %1606 = vmatprep.subr.mxu0 0.0
        %1607 = vmatpush1.msra.mxu0 0.0
        %1608 = vmatprep.subr.mxu0 0.0
        %1609 = vmatpush1.msra.mxu0 0.0
        %1610 = vmatprep.subr.mxu0 0.0
        %1611 = vmatpush1.msra.mxu0 0.0
        %1612 = vmatprep.subr.mxu0 0.0
        %1613 = vmatpush1.msra.mxu0 0.0
        %1614 = vmatprep.subr.mxu0 0.0
        %1615 = vmatpush1.msra.mxu0 0.0
        %1616 = vmatprep.subr.mxu0 0.0
        %1617 = vmatpush1.msra.mxu0 0.0
        %1618 = vmatprep.subr.mxu0 0.0
        %1619 = vmatpush1.msra.mxu0 0.0
        %1620 = vmatprep.subr.mxu0 0.0
        %1621 = vmatpush1.msra.mxu0 0.0
        %1622 = vmatprep.subr.mxu0 0.0
        %1623 = vmatpush1.msra.mxu0 0.0
        %1624 = vmatprep.subr.mxu0 0.0
        %1625 = vmatpush1.msra.mxu0 0.0
        %1626 = vmatprep.subr.mxu0 0.0
        %1627 = vmatpush1.msra.mxu0 0.0
        %1628 = vmatprep.subr.mxu0 0.0
        %1629 = vmatpush1.msra.mxu0 0.0
        %1630 = vmatprep.subr.mxu0 0.0
        %1631 = vmatpush1.msra.mxu0 0.0
        %1632 = vmatprep.subr.mxu0 0.0
        %1633 = vmatpush1.msra.mxu0 0.0
        %1634 = vmatprep.subr.mxu0 0.0
        %1635 = vmatpush1.msra.mxu0 0.0
        %1636 = vmatprep.mubr.f32.mxu0 0.0
        %1637 = vmatmul.mubr.f32.gmra.mrb[0].mxu0 %v1144
        %v1638 = vpop.f32.mrb[0].mxu0
        %v1639 = vadd.f32 %v1140, %v1638
        %v1640 = vpop.f32.mrb[0].mxu0
        %v1641 = vadd.f32 %v1140, %v1640
        %1642 = vdwg.mxu0
        %1643 = vmatprep.subr.mxu0 %v1086
        %1644 = vmatpush1.msra.mxu0 %v1085
        %1645 = vmatprep.subr.mxu0 %v1102
        %1646 = vmatpush1.msra.mxu0 %v1101
        %1647 = vmatprep.subr.mxu0 %v1118
        %1648 = vmatpush1.msra.mxu0 %v1117
        %1649 = vmatprep.subr.mxu0 %v1134
        %1650 = vmatpush1.msra.mxu0 %v1133
        %1651 = vmatprep.subr.mxu0 0.0
        %1652 = vmatpush1.msra.mxu0 0.0
        %1653 = vmatprep.subr.mxu0 0.0
        %1654 = vmatpush1.msra.mxu0 0.0
        %1655 = vmatprep.subr.mxu0 0.0
        %1656 = vmatpush1.msra.mxu0 0.0
        %1657 = vmatprep.subr.mxu0 0.0
        %1658 = vmatpush1.msra.mxu0 0.0
        %1659 = vmatprep.subr.mxu0 0.0
        %1660 = vmatpush1.msra.mxu0 0.0
        %1661 = vmatprep.subr.mxu0 0.0
        %1662 = vmatpush1.msra.mxu0 0.0
        %1663 = vmatprep.subr.mxu0 0.0
        %1664 = vmatpush1.msra.mxu0 0.0
        %1665 = vmatprep.subr.mxu0 0.0
        %1666 = vmatpush1.msra.mxu0 0.0
        %1667 = vmatprep.subr.mxu0 0.0
        %1668 = vmatpush1.msra.mxu0 0.0
        %1669 = vmatprep.subr.mxu0 0.0
        %1670 = vmatpush1.msra.mxu0 0.0
        %1671 = vmatprep.subr.mxu0 0.0
        %1672 = vmatpush1.msra.mxu0 0.0
        %1673 = vmatprep.subr.mxu0 0.0
        %1674 = vmatpush1.msra.mxu0 0.0
        %1675 = vmatprep.subr.mxu0 0.0
        %1676 = vmatpush1.msra.mxu0 0.0
        %1677 = vmatprep.subr.mxu0 0.0
        %1678 = vmatpush1.msra.mxu0 0.0
        %1679 = vmatprep.subr.mxu0 0.0
        %1680 = vmatpush1.msra.mxu0 0.0
        %1681 = vmatprep.subr.mxu0 0.0
        %1682 = vmatpush1.msra.mxu0 0.0
        %1683 = vmatprep.subr.mxu0 0.0
        %1684 = vmatpush1.msra.mxu0 0.0
        %1685 = vmatprep.subr.mxu0 0.0
        %1686 = vmatpush1.msra.mxu0 0.0
        %1687 = vmatprep.subr.mxu0 0.0
        %1688 = vmatpush1.msra.mxu0 0.0
        %1689 = vmatprep.subr.mxu0 0.0
        %1690 = vmatpush1.msra.mxu0 0.0
        %1691 = vmatprep.subr.mxu0 0.0
        %1692 = vmatpush1.msra.mxu0 0.0
        %1693 = vmatprep.subr.mxu0 0.0
        %1694 = vmatpush1.msra.mxu0 0.0
        %1695 = vmatprep.subr.mxu0 0.0
        %1696 = vmatpush1.msra.mxu0 0.0
        %1697 = vmatprep.subr.mxu0 0.0
        %1698 = vmatpush1.msra.mxu0 0.0
        %1699 = vmatprep.subr.mxu0 0.0
        %1700 = vmatpush1.msra.mxu0 0.0
        %1701 = vmatprep.subr.mxu0 0.0
        %1702 = vmatpush1.msra.mxu0 0.0
        %1703 = vmatprep.subr.mxu0 0.0
        %1704 = vmatpush1.msra.mxu0 0.0
        %1705 = vmatprep.subr.mxu0 0.0
        %1706 = vmatpush1.msra.mxu0 0.0
        %1707 = vmatprep.mubr.f32.mxu0 0.0
        %1708 = vmatmul.mubr.f32.gmra.mrb[0].mxu0 %v1144
        %v1709 = vpop.f32.mrb[0].mxu0
        %v1710 = vadd.f32 %v1140, %v1709
        %v1711 = vpop.f32.mrb[0].mxu0
        %v1712 = vadd.f32 %v1140, %v1711
        %1713 = vdwg.mxu0
        %v1714 = vsel %vm326, %v1213, -inf
        %v1715 = vrot.slane %v1714, 4
        %v1716 = vmax.f32 %v1714, %v1715
        %v1717 = vrot.slane %v1716, 2
        %v1718 = vmax.f32 %v1716, %v1717
        %v1719 = vrot.slane %v1718, 1
        %v1720 = vmax.f32 %v1718, %v1719
        %v1721 = vsel %vm326, %v1215, -inf
        %v1722 = vrot.slane %v1721, 4
        %v1723 = vmax.f32 %v1721, %v1722
        %v1724 = vrot.slane %v1723, 2
        %v1725 = vmax.f32 %v1723, %v1724
        %v1726 = vrot.slane %v1725, 1
        %v1727 = vmax.f32 %v1725, %v1726
        %v1728 = vsel %vm326, %v1284, -inf
        %v1729 = vrot.slane %v1728, 4
        %v1730 = vmax.f32 %v1728, %v1729
        %v1731 = vrot.slane %v1730, 2
        %v1732 = vmax.f32 %v1730, %v1731
        %v1733 = vrot.slane %v1732, 1
        %v1734 = vmax.f32 %v1732, %v1733
        %v1735 = vsel %vm326, %v1286, -inf
        %v1736 = vrot.slane %v1735, 4
        %v1737 = vmax.f32 %v1735, %v1736
        %v1738 = vrot.slane %v1737, 2
        %v1739 = vmax.f32 %v1737, %v1738
        %v1740 = vrot.slane %v1739, 1
        %v1741 = vmax.f32 %v1739, %v1740
        %v1742 = vsel %vm326, %v1355, -inf
        %v1743 = vrot.slane %v1742, 4
        %v1744 = vmax.f32 %v1742, %v1743
        %v1745 = vrot.slane %v1744, 2
        %v1746 = vmax.f32 %v1744, %v1745
        %v1747 = vrot.slane %v1746, 1
        %v1748 = vmax.f32 %v1746, %v1747
        %v1749 = vsel %vm326, %v1357, -inf
        %v1750 = vrot.slane %v1749, 4
        %v1751 = vmax.f32 %v1749, %v1750
        %v1752 = vrot.slane %v1751, 2
        %v1753 = vmax.f32 %v1751, %v1752
        %v1754 = vrot.slane %v1753, 1
        %v1755 = vmax.f32 %v1753, %v1754
        %v1756 = vsel %vm326, %v1426, -inf
        %v1757 = vrot.slane %v1756, 4
        %v1758 = vmax.f32 %v1756, %v1757
        %v1759 = vrot.slane %v1758, 2
        %v1760 = vmax.f32 %v1758, %v1759
        %v1761 = vrot.slane %v1760, 1
        %v1762 = vmax.f32 %v1760, %v1761
        %v1763 = vsel %vm326, %v1428, -inf
        %v1764 = vrot.slane %v1763, 4
        %v1765 = vmax.f32 %v1763, %v1764
        %v1766 = vrot.slane %v1765, 2
        %v1767 = vmax.f32 %v1765, %v1766
        %v1768 = vrot.slane %v1767, 1
        %v1769 = vmax.f32 %v1767, %v1768
        %v1770 = vsel %vm326, %v1497, -inf
        %v1771 = vrot.slane %v1770, 4
        %v1772 = vmax.f32 %v1770, %v1771
        %v1773 = vrot.slane %v1772, 2
        %v1774 = vmax.f32 %v1772, %v1773
        %v1775 = vrot.slane %v1774, 1
        %v1776 = vmax.f32 %v1774, %v1775
        %v1777 = vsel %vm326, %v1499, -inf
        %v1778 = vrot.slane %v1777, 4
        %v1779 = vmax.f32 %v1777, %v1778
        %v1780 = vrot.slane %v1779, 2
        %v1781 = vmax.f32 %v1779, %v1780
        %v1782 = vrot.slane %v1781, 1
        %v1783 = vmax.f32 %v1781, %v1782
        %v1784 = vsel %vm326, %v1568, -inf
        %v1785 = vrot.slane %v1784, 4
        %v1786 = vmax.f32 %v1784, %v1785
        %v1787 = vrot.slane %v1786, 2
        %v1788 = vmax.f32 %v1786, %v1787
        %v1789 = vrot.slane %v1788, 1
        %v1790 = vmax.f32 %v1788, %v1789
        %v1791 = vsel %vm326, %v1570, -inf
        %v1792 = vrot.slane %v1791, 4
        %v1793 = vmax.f32 %v1791, %v1792
        %v1794 = vrot.slane %v1793, 2
        %v1795 = vmax.f32 %v1793, %v1794
        %v1796 = vrot.slane %v1795, 1
        %v1797 = vmax.f32 %v1795, %v1796
        %v1798 = vsel %vm326, %v1639, -inf
        %v1799 = vrot.slane %v1798, 4
        %v1800 = vmax.f32 %v1798, %v1799
        %v1801 = vrot.slane %v1800, 2
        %v1802 = vmax.f32 %v1800, %v1801
        %v1803 = vrot.slane %v1802, 1
        %v1804 = vmax.f32 %v1802, %v1803
        %v1805 = vsel %vm326, %v1641, -inf
        %v1806 = vrot.slane %v1805, 4
        %v1807 = vmax.f32 %v1805, %v1806
        %v1808 = vrot.slane %v1807, 2
        %v1809 = vmax.f32 %v1807, %v1808
        %v1810 = vrot.slane %v1809, 1
        %v1811 = vmax.f32 %v1809, %v1810
        %v1812 = vsel %vm326, %v1710, -inf
        %v1813 = vrot.slane %v1812, 4
        %v1814 = vmax.f32 %v1812, %v1813
        %v1815 = vrot.slane %v1814, 2
        %v1816 = vmax.f32 %v1814, %v1815
        %v1817 = vrot.slane %v1816, 1
        %v1818 = vmax.f32 %v1816, %v1817
        %v1819 = vsel %vm326, %v1712, -inf
        %v1820 = vrot.slane %v1819, 4
        %v1821 = vmax.f32 %v1819, %v1820
        %v1822 = vrot.slane %v1821, 2
        %v1823 = vmax.f32 %v1821, %v1822
        %v1824 = vrot.slane %v1823, 1
        %v1825 = vmax.f32 %v1823, %v1824
        %v1826 = vsub.f32 %v1213, %v1720
        %v1827 = vsub.f32 %v1215, %v1727
        %v1828 = vsub.f32 %v1284, %v1734
        %v1829 = vsub.f32 %v1286, %v1741
        %v1830 = vsub.f32 %v1355, %v1748
        %v1831 = vsub.f32 %v1357, %v1755
        %v1832 = vsub.f32 %v1426, %v1762
        %v1833 = vsub.f32 %v1428, %v1769
        %v1834 = vsub.f32 %v1497, %v1776
        %v1835 = vsub.f32 %v1499, %v1783
        %v1836 = vsub.f32 %v1568, %v1790
        %v1837 = vsub.f32 %v1570, %v1797
        %v1838 = vsub.f32 %v1639, %v1804
        %v1839 = vsub.f32 %v1641, %v1811
        %v1840 = vsub.f32 %v1710, %v1818
        %v1841 = vsub.f32 %v1712, %v1825
        %v1842 = vmul.f32 %v1826, 1.442695
        %v1843 = vpow.pop %v1842
        %v1844 = vmul.f32 %v1827, 1.442695
        %v1845 = vpow.pop %v1844
        %v1846 = vmul.f32 %v1828, 1.442695
        %v1847 = vpow.pop %v1846
        %v1848 = vmul.f32 %v1829, 1.442695
        %v1849 = vpow.pop %v1848
        %v1850 = vmul.f32 %v1830, 1.442695
        %v1851 = vpow.pop %v1850
        %v1852 = vmul.f32 %v1831, 1.442695
        %v1853 = vpow.pop %v1852
        %v1854 = vmul.f32 %v1832, 1.442695
        %v1855 = vpow.pop %v1854
        %v1856 = vmul.f32 %v1833, 1.442695
        %v1857 = vpow.pop %v1856
        %v1858 = vmul.f32 %v1834, 1.442695
        %v1859 = vpow.pop %v1858
        %v1860 = vmul.f32 %v1835, 1.442695
        %v1861 = vpow.pop %v1860
        %v1862 = vmul.f32 %v1836, 1.442695
        %v1863 = vpow.pop %v1862
        %v1864 = vmul.f32 %v1837, 1.442695
        %v1865 = vpow.pop %v1864
        %v1866 = vmul.f32 %v1838, 1.442695
        %v1867 = vpow.pop %v1866
        %v1868 = vmul.f32 %v1839, 1.442695
        %v1869 = vpow.pop %v1868
        %v1870 = vmul.f32 %v1840, 1.442695
        %v1871 = vpow.pop %v1870
        %v1872 = vmul.f32 %v1841, 1.442695
        %v1873 = vpow.pop %v1872
        %v1874 = vsel %vm326, %v1843, 0.0
        %v1875 = vrot.slane %v1874, 4
        %v1876 = vadd.f32 %v1874, %v1875
        %v1877 = vrot.slane %v1876, 2
        %v1878 = vadd.f32 %v1876, %v1877
        %v1879 = vrot.slane %v1878, 1
        %v1880 = vadd.f32 %v1878, %v1879
        %v1881 = vsel %vm326, %v1845, 0.0
        %v1882 = vrot.slane %v1881, 4
        %v1883 = vadd.f32 %v1881, %v1882
        %v1884 = vrot.slane %v1883, 2
        %v1885 = vadd.f32 %v1883, %v1884
        %v1886 = vrot.slane %v1885, 1
        %v1887 = vadd.f32 %v1885, %v1886
        %v1888 = vsel %vm326, %v1847, 0.0
        %v1889 = vrot.slane %v1888, 4
        %v1890 = vadd.f32 %v1888, %v1889
        %v1891 = vrot.slane %v1890, 2
        %v1892 = vadd.f32 %v1890, %v1891
        %v1893 = vrot.slane %v1892, 1
        %v1894 = vadd.f32 %v1892, %v1893
        %v1895 = vsel %vm326, %v1849, 0.0
        %v1896 = vrot.slane %v1895, 4
        %v1897 = vadd.f32 %v1895, %v1896
        %v1898 = vrot.slane %v1897, 2
        %v1899 = vadd.f32 %v1897, %v1898
        %v1900 = vrot.slane %v1899, 1
        %v1901 = vadd.f32 %v1899, %v1900
        %v1902 = vsel %vm326, %v1851, 0.0
        %v1903 = vrot.slane %v1902, 4
        %v1904 = vadd.f32 %v1902, %v1903
        %v1905 = vrot.slane %v1904, 2
        %v1906 = vadd.f32 %v1904, %v1905
        %v1907 = vrot.slane %v1906, 1
        %v1908 = vadd.f32 %v1906, %v1907
        %v1909 = vsel %vm326, %v1853, 0.0
        %v1910 = vrot.slane %v1909, 4
        %v1911 = vadd.f32 %v1909, %v1910
        %v1912 = vrot.slane %v1911, 2
        %v1913 = vadd.f32 %v1911, %v1912
        %v1914 = vrot.slane %v1913, 1
        %v1915 = vadd.f32 %v1913, %v1914
        %v1916 = vsel %vm326, %v1855, 0.0
        %v1917 = vrot.slane %v1916, 4
        %v1918 = vadd.f32 %v1916, %v1917
        %v1919 = vrot.slane %v1918, 2
        %v1920 = vadd.f32 %v1918, %v1919
        %v1921 = vrot.slane %v1920, 1
        %v1922 = vadd.f32 %v1920, %v1921
        %v1923 = vsel %vm326, %v1857, 0.0
        %v1924 = vrot.slane %v1923, 4
        %v1925 = vadd.f32 %v1923, %v1924
        %v1926 = vrot.slane %v1925, 2
        %v1927 = vadd.f32 %v1925, %v1926
        %v1928 = vrot.slane %v1927, 1
        %v1929 = vadd.f32 %v1927, %v1928
        %v1930 = vsel %vm326, %v1859, 0.0
        %v1931 = vrot.slane %v1930, 4
        %v1932 = vadd.f32 %v1930, %v1931
        %v1933 = vrot.slane %v1932, 2
        %v1934 = vadd.f32 %v1932, %v1933
        %v1935 = vrot.slane %v1934, 1
        %v1936 = vadd.f32 %v1934, %v1935
        %v1937 = vsel %vm326, %v1861, 0.0
        %v1938 = vrot.slane %v1937, 4
        %v1939 = vadd.f32 %v1937, %v1938
        %v1940 = vrot.slane %v1939, 2
        %v1941 = vadd.f32 %v1939, %v1940
        %v1942 = vrot.slane %v1941, 1
        %v1943 = vadd.f32 %v1941, %v1942
        %v1944 = vsel %vm326, %v1863, 0.0
        %v1945 = vrot.slane %v1944, 4
        %v1946 = vadd.f32 %v1944, %v1945
        %v1947 = vrot.slane %v1946, 2
        %v1948 = vadd.f32 %v1946, %v1947
        %v1949 = vrot.slane %v1948, 1
        %v1950 = vadd.f32 %v1948, %v1949
        %v1951 = vsel %vm326, %v1865, 0.0
        %v1952 = vrot.slane %v1951, 4
        %v1953 = vadd.f32 %v1951, %v1952
        %v1954 = vrot.slane %v1953, 2
        %v1955 = vadd.f32 %v1953, %v1954
        %v1956 = vrot.slane %v1955, 1
        %v1957 = vadd.f32 %v1955, %v1956
        %v1958 = vsel %vm326, %v1867, 0.0
        %v1959 = vrot.slane %v1958, 4
        %v1960 = vadd.f32 %v1958, %v1959
        %v1961 = vrot.slane %v1960, 2
        %v1962 = vadd.f32 %v1960, %v1961
        %v1963 = vrot.slane %v1962, 1
        %v1964 = vadd.f32 %v1962, %v1963
        %v1965 = vsel %vm326, %v1869, 0.0
        %v1966 = vrot.slane %v1965, 4
        %v1967 = vadd.f32 %v1965, %v1966
        %v1968 = vrot.slane %v1967, 2
        %v1969 = vadd.f32 %v1967, %v1968
        %v1970 = vrot.slane %v1969, 1
        %v1971 = vadd.f32 %v1969, %v1970
        %v1972 = vsel %vm326, %v1871, 0.0
        %v1973 = vrot.slane %v1972, 4
        %v1974 = vadd.f32 %v1972, %v1973
        %v1975 = vrot.slane %v1974, 2
        %v1976 = vadd.f32 %v1974, %v1975
        %v1977 = vrot.slane %v1976, 1
        %v1978 = vadd.f32 %v1976, %v1977
        %v1979 = vsel %vm326, %v1873, 0.0
        %v1980 = vrot.slane %v1979, 4
        %v1981 = vadd.f32 %v1979, %v1980
        %v1982 = vrot.slane %v1981, 2
        %v1983 = vadd.f32 %v1981, %v1982
        %v1984 = vrot.slane %v1983, 1
        %v1985 = vadd.f32 %v1983, %v1984
        %v1986 = vrcp.pop %v1880
        %v1987 = vrcp.pop %v1887
        %v1988 = vrcp.pop %v1894
        %v1989 = vrcp.pop %v1901
        %v1990 = vrcp.pop %v1908
        %v1991 = vrcp.pop %v1915
        %v1992 = vrcp.pop %v1922
        %v1993 = vrcp.pop %v1929
        %v1994 = vrcp.pop %v1936
        %v1995 = vrcp.pop %v1943
        %v1996 = vrcp.pop %v1950
        %v1997 = vrcp.pop %v1957
        %v1998 = vrcp.pop %v1964
        %v1999 = vrcp.pop %v1971
        %v2000 = vrcp.pop %v1978
        %v2001 = vrcp.pop %v1985
        %v2002 = vmul.f32 %v1880, %v1986
        %v2003 = vmul.f32 %v1887, %v1987
        %v2004 = vmul.f32 %v1894, %v1988
        %v2005 = vmul.f32 %v1901, %v1989
        %v2006 = vmul.f32 %v1908, %v1990
        %v2007 = vmul.f32 %v1915, %v1991
        %v2008 = vmul.f32 %v1922, %v1992
        %v2009 = vmul.f32 %v1929, %v1993
        %v2010 = vmul.f32 %v1936, %v1994
        %v2011 = vmul.f32 %v1943, %v1995
        %v2012 = vmul.f32 %v1950, %v1996
        %v2013 = vmul.f32 %v1957, %v1997
        %v2014 = vmul.f32 %v1964, %v1998
        %v2015 = vmul.f32 %v1971, %v1999
        %v2016 = vmul.f32 %v1978, %v2000
        %v2017 = vmul.f32 %v1985, %v2001
        %v2018 = vsub.f32 2.0, %v2002
        %v2019 = vsub.f32 2.0, %v2003
        %v2020 = vsub.f32 2.0, %v2004
        %v2021 = vsub.f32 2.0, %v2005
        %v2022 = vsub.f32 2.0, %v2006
        %v2023 = vsub.f32 2.0, %v2007
        %v2024 = vsub.f32 2.0, %v2008
        %v2025 = vsub.f32 2.0, %v2009
        %v2026 = vsub.f32 2.0, %v2010
        %v2027 = vsub.f32 2.0, %v2011
        %v2028 = vsub.f32 2.0, %v2012
        %v2029 = vsub.f32 2.0, %v2013
        %v2030 = vsub.f32 2.0, %v2014
        %v2031 = vsub.f32 2.0, %v2015
        %v2032 = vsub.f32 2.0, %v2016
        %v2033 = vsub.f32 2.0, %v2017
        %v2034 = vmul.f32 %v1986, %v2018
        %v2035 = vmul.f32 %v1987, %v2019
        %v2036 = vmul.f32 %v1988, %v2020
        %v2037 = vmul.f32 %v1989, %v2021
        %v2038 = vmul.f32 %v1990, %v2022
        %v2039 = vmul.f32 %v1991, %v2023
        %v2040 = vmul.f32 %v1992, %v2024
        %v2041 = vmul.f32 %v1993, %v2025
        %v2042 = vmul.f32 %v1994, %v2026
        %v2043 = vmul.f32 %v1995, %v2027
        %v2044 = vmul.f32 %v1996, %v2028
        %v2045 = vmul.f32 %v1997, %v2029
        %v2046 = vmul.f32 %v1998, %v2030
        %v2047 = vmul.f32 %v1999, %v2031
        %v2048 = vmul.f32 %v2000, %v2032
        %v2049 = vmul.f32 %v2001, %v2033
        %v2050 = vmul.f32 %v1843, %v2034
        %v2051 = vmul.f32 %v1845, %v2035
        %v2052 = vmul.f32 %v1847, %v2036
        %v2053 = vmul.f32 %v1849, %v2037
        %v2054 = vmul.f32 %v1851, %v2038
        %v2055 = vmul.f32 %v1853, %v2039
        %v2056 = vmul.f32 %v1855, %v2040
        %v2057 = vmul.f32 %v1857, %v2041
        %v2058 = vmul.f32 %v1859, %v2042
        %v2059 = vmul.f32 %v1861, %v2043
        %v2060 = vmul.f32 %v1863, %v2044
        %v2061 = vmul.f32 %v1865, %v2045
        %v2062 = vmul.f32 %v1867, %v2046
        %v2063 = vmul.f32 %v1869, %v2047
        %v2064 = vmul.f32 %v1871, %v2048
        %v2065 = vmul.f32 %v1873, %v2049
        %v2082 = vcombine.low %v2050, %v2051
        %v2083 = vcombine.low %v2052, %v2053
        %v2084 = vcombine.low %v2054, %v2055
        %v2085 = vcombine.low %v2056, %v2057
        %v2086 = vcombine.low %v2058, %v2059
        %v2087 = vcombine.low %v2060, %v2061
        %v2088 = vcombine.low %v2062, %v2063
        %v2089 = vcombine.low %v2064, %v2065
        %2098 = vst [vmem:[%s258] sm:$0xff] %v2082
        %2099 = vst [vmem:[%s258 + $0x8] sm:$0xff] %v2083
        %2100 = vst [vmem:[%s258 + $0x10] sm:$0xff] %v2084
        %2101 = vst [vmem:[%s258 + $0x18] sm:$0xff] %v2085
        %2102 = vst [vmem:[%s258 + $0x20] sm:$0xff] %v2086
        %2103 = vst [vmem:[%s258 + $0x28] sm:$0xff] %v2087
        %2104 = vst [vmem:[%s258 + $0x30] sm:$0xff] %v2088
        %2105 = vst [vmem:[%s258 + $0x38] sm:$0xff] %v2089
        %s2106 = sand.u32 %s156, 1
        %s2107 = scalar_lea.sflag [#allocation4], %s2106
        %s2108 = sand.u32 %s156, 1
        %s2109 = smul.addr %s2108, 64
        %s2110 = scalar_lea.vmem [#allocation5], %s2109
        // Predicated region
        $region45: #{tpu_custom_call.1} parent=39 // pred_check
          %p2111 = pneg %p166
        $region46: #{tpu_custom_call.1} parent=39 // pred_check_branch
          %2113 = sbr.rel (%p2111) target = $region48
        $region47: #{tpu_custom_call.1} parent=39 // pred_region
          %s2114 = smul.u32 16, %s26
          %s2116 = ssub.s32 1024, 1024
          %2117 = vsyncadd %s2107, %s2116
          %s2118 = smul.addr %s27, 16
          %s2119 = sadd.s32 %s2114, %s2118
          %s2120 = smul.addr %s2119, 64
          %s2121 = scalar_lea.hbm %s5, %s2120
          %s2123 = sshll.u32 %s2110, 4
          %s2124 = int_to_ptr.vmem [resolvable:$true] %s2123
          %2126 = dma.vmem_to_hbm [thread:$0]  %s2124, 1024, %s2121, %s2107
        $region48: #{tpu_custom_call.1} parent=39 // pred_fallthru
          _
      $region40: #{tpu_custom_call.1} parent=5 // pred_fallthru
        _
      %p2127 = scmp.le.s32.totalorder 2, %s17
      // Predicated region
      $region49: #{tpu_custom_call.1} parent=5 // pred_check
        %p2128 = pneg %p2127
      $region50: #{tpu_custom_call.1} parent=5 // pred_check_branch
        %2130 = sbr.rel (%p2128) target = $region52
      $region51: #{tpu_custom_call.1} parent=5 // pred_region
        %s2131 = ssub.s32 %s17, 2
        // Predicated region
        $region53: #{tpu_custom_call.1} parent=51 // pred_check
          %p2132 = pneg %p172
        $region54: #{tpu_custom_call.1} parent=51 // pred_check_branch
          %2134 = sbr.rel (%p2132) target = $region56
        $region55: #{tpu_custom_call.1} parent=51 // pred_region
          %s2135 = sand.u32 %s157, 1
          %s2136 = scalar_lea.sflag [#allocation4], %s2135
          %s2137 = sand.u32 %s157, 1
          %s2138 = smul.addr %s2137, 64
          %s2139 = scalar_lea.vmem [#allocation5], %s2138
          %2140 = dma.done %s2136, 1024
        $region56: #{tpu_custom_call.1} parent=51 // pred_fallthru
          _
      $region52: #{tpu_custom_call.1} parent=5 // pred_fallthru
        _
    $region6: #{tpu_custom_call.1} parent=1 // loop_footer
      %s21 = sadd.s32 1, %s17
    $region7: #{tpu_custom_call.1} parent=1 // loop_footer_branch
      %16 = sbr.rel target = $region3
    $region8: #{tpu_custom_call.1} parent=1 // loop_exit
      _
    %2141 = vsyncpa [#allocation3], 1
    %s2142 = scalar_lea.sflag [#allocation3], 1
    %2143 = vsyncpa %s2142, 1
    %2144 = vsyncpa [#allocation4], 1
    %s2145 = scalar_lea.sflag [#allocation4], 1
    %2146 = vsyncpa %s2145, 1

</llo_original>
